<compile_context>
chip_gen: v7x
topology: tpu7x:2x2x1
jax: 0.10.0
libtpu: 0.0.40
codegen_flags: <defaults>
</compile_context>

<pallas_src>
import math

import jax
import jax.numpy as jnp
from jax import lax
from jax.experimental import pallas as pl
from jax.experimental.pallas import tpu as pltpu


def _make_kernel(L1, TM):
    """Kernel factory closing over static shapes."""

    def kernel(rho_ref, p_ref, beta_ref, attn_ref, u_ref, part_ref):
        # p block: (TM, Ip) — flattened (batch*time) rows, lane-padded stocks.
        p = p_ref[...].astype(jnp.float32)

        # virt[r, i] = sum_j p[r, j] * beta[i, j]      (== p @ beta.T)
        virt = lax.dot_general(p, beta_ref[...],
                               dimension_numbers=(((1,), (1,)), ((), ())),
                               preferred_element_type=jnp.float32)
        # u[r, i] = sum_j virt[r, j] * attn[i, j]      (== virt @ attn.T)
        u = lax.dot_general(virt, attn_ref[...],
                            dimension_numbers=(((1,), (1,)), ((), ())),
                            preferred_element_type=jnp.float32)
        u_ref[...] = u.astype(u_ref.dtype)

        # loss_beta partial: sum((p - virt)^2).  (virt is detached in torch,
        # which only affects gradients, not the forward value.)
        d1 = p - virt
        sum_beta = jnp.sum(d1 * d1)

        # loss_station partial: sum over t>=1 of (u[t] - rho*u[t-1])^2 per batch
        # element.  Blocks are aligned to multiples of L1 rows, so an in-block
        # sublane roll plus a "t == 0" row mask is exact; zero-padded tail rows
        # contribute exactly 0.
        rho = rho_ref[0]
        shifted = pltpu.roll(u, shift=1, axis=0)
        row = lax.broadcasted_iota(jnp.int32, (TM, 1), 0)
        grow = pl.program_id(0) * TM + row
        d2 = jnp.where((grow % L1) == 0, 0.0, u - rho * shifted)
        sum_station = jnp.sum(d2 * d2)

        # Sublane-dense (8, 128) partials tile: row 0 = loss_beta sum,
        # row 1 = loss_station sum (replicated across lanes; wrapper reads lane 0).
        ridx = lax.broadcasted_iota(jnp.int32, (8, 128), 0)
        part_ref[0] = jnp.where(ridx == 0, sum_beta,
                                jnp.where(ridx == 1, sum_station, 0.0))

    return kernel


def stock_level_factor_learning(prices_seq, beta, attn_weights, _rho,
                                lambda_ic=0.1):
    # TODO(synk): active_mask path not implemented — the torch broadcasting
    # (unsqueeze(1).unsqueeze(1)) is shape-ambiguous; only active_mask=None
    # semantics are reproduced.
    B, L1, I = prices_seq.shape

    # ---- grid-invariant parameter prep (hoisted out of the kernel) ----
    eye = jnp.eye(I, dtype=bool)
    beta_m = jnp.where(eye, 0.0, beta).astype(jnp.float32)
    logits = jnp.where(eye, -1.0e9, attn_weights).astype(jnp.float32)
    attn = jax.nn.softmax(logits, axis=1)
    rho_t = jnp.tanh(jnp.asarray(_rho, jnp.float32)).reshape(1)   # (1,) scalar

    # ---- flatten (B, L1, I) -> (M, I); pad to lane/sublane-dense tiles ----
    M = B * L1
    Ip = ((I + 127) // 128) * 128

    # Row blocks are multiples of lcm(L1, 8): multiple of 8 for the (8,128)
    # BlockSpec rule, multiple of L1 so blocks align to batch boundaries.
    base = (L1 * 8) // math.gcd(L1, 8)
    n_units = -(-M // base)

    # ---- VMEM-budgeted tile selection (safe on v7x 64 MiB, big on v5e/v6e) ----
    VMEM_BUDGET = 40 * (1 << 20)
    weights_bytes = 2 * Ip * Ip * 4          # beta + attn, single-buffered, f32
    # TODO(synk): for Ip >= 2048 the resident (Ip,Ip) weights should be row-tiled
    # via an extra grid axis over attn rows; not needed at these sizes.
    avail = max(VMEM_BUDGET - weights_bytes, 2 * (1 << 20))
    max_rows = max(base, int(avail // (7 * Ip * 4)))   # blocks + intermediates
    target_rows = min(512, max_rows)

    units_per_block = max(1, min(n_units, target_rows // base))
    num_steps = -(-n_units // units_per_block)
    if num_steps < 2 and n_units >= 2:
        # Guarantee >= 2 grid steps so a v7x megacore can split the parallel axis.
        units_per_block = (n_units + 1) // 2
        num_steps = -(-n_units // units_per_block)
    TM = units_per_block * base
    Mp = num_steps * TM

    prices_p = jnp.pad(prices_seq.reshape(M, I), ((0, Mp - M), (0, Ip - I)))
    beta_p = jnp.pad(beta_m, ((0, Ip - I), (0, Ip - I)))
    attn_p = jnp.pad(attn, ((0, Ip - I), (0, Ip - I)))

    kernel = _make_kernel(L1, TM)

    def _call(single_buffer_weights):
        w_kw = dict(pipeline_mode=pl.Buffered(1)) if single_buffer_weights else {}
        return pl.pallas_call(
            kernel,
            out_shape=(
                jax.ShapeDtypeStruct((Mp, Ip), prices_seq.dtype),
                jax.ShapeDtypeStruct((num_steps, 8, 128), jnp.float32),
            ),
            grid_spec=pltpu.PrefetchScalarGridSpec(
                num_scalar_prefetch=1,             # tanh(rho) scalar in SMEM
                grid=(num_steps,),
                in_specs=[
                    pl.BlockSpec((TM, Ip), lambda s, rho: (s, 0)),           # prices
                    pl.BlockSpec((Ip, Ip), lambda s, rho: (0, 0), **w_kw),   # beta
                    pl.BlockSpec((Ip, Ip), lambda s, rho: (0, 0), **w_kw),   # attn
                ],
                out_specs=(
                    pl.BlockSpec((TM, Ip), lambda s, rho: (s, 0)),           # u rows
                    pl.BlockSpec((1, 8, 128), lambda s, rho: (s, 0, 0)),     # partials
                ),
            ),
            compiler_params=pltpu.CompilerParams(
                dimension_semantics=("parallel",),   # no cross-step state
                vmem_limit_bytes=48 * 1024 * 1024,
            ),
        )(rho_t, prices_p, beta_p, attn_p)

    try:
        u_padded, partials = _call(True)
    except Exception:
        # Fallback if pipeline_mode=pl.Buffered(1) is rejected by this JAX build.
        u_padded, partials = _call(False)

    u_seq = u_padded[:M, :I].reshape(B, L1, I)

    sum_beta = jnp.sum(partials[:, 0, 0])
    sum_station = jnp.sum(partials[:, 1, 0])
    loss_beta = sum_beta / (B * L1 * I)
    # Guard L1 == 1 (torch's mse_loss over an empty tensor would be NaN).
    loss_station = sum_station / (B * max(L1 - 1, 1) * I)
    loss = loss_beta + lambda_ic * loss_station
    return u_seq, loss, {"loss_beta": loss_beta, "loss_station": loss_station}


def _reference(prices_seq, beta, attn_weights, _rho, lambda_ic=0.1):
    B, L1, I = prices_seq.shape
    eye = jnp.eye(I, dtype=bool)
    beta_m = jnp.where(eye, 0.0, beta)
    logits = jnp.where(eye, -1.0e9, attn_weights)
    attn = jax.nn.softmax(logits, axis=1)
    virt = prices_seq @ beta_m.T
    u_seq = virt @ attn.T
    loss_beta = jnp.mean((prices_seq - virt) ** 2)
    rho = jnp.tanh(_rho)[0]
    loss_station = jnp.mean((u_seq[:, 1:] - rho * u_seq[:, :-1]) ** 2)
    return u_seq, loss_beta + lambda_ic * loss_station, loss_beta, loss_station


if __name__ == "__main__":
    B, L1, I = 2, 8, 32
    lambda_ic = 0.1

    key = jax.random.PRNGKey(0)
    k_prices, k_beta = jax.random.split(key)

    prices_seq = jax.random.normal(k_prices, (B, L1, I), dtype=jnp.float32)
    # Module __init__: attn_weights = zeros(I,I); beta = randn(I,I)*0.01; _rho = zeros(1)
    attn_weights = jnp.zeros((I, I), dtype=jnp.float32)
    beta = jax.random.normal(k_beta, (I, I), dtype=jnp.float32) * 0.01
    _rho = jnp.zeros((1,), dtype=jnp.float32)

    u_seq, loss, aux = stock_level_factor_learning(
        prices_seq, beta, attn_weights, _rho, lambda_ic)
    jax.block_until_ready((u_seq, loss, aux))

    u_ref, loss_ref_val, lb_ref, ls_ref = _reference(
        prices_seq, beta, attn_weights, _rho, lambda_ic)
    assert jnp.allclose(u_seq, u_ref, atol=1e-5, rtol=1e-5)
    assert jnp.allclose(loss, loss_ref_val, atol=1e-5, rtol=1e-5)
    assert jnp.allclose(aux["loss_beta"], lb_ref, atol=1e-5, rtol=1e-5)
    assert jnp.allclose(aux["loss_station"], ls_ref, atol=1e-5, rtol=1e-5)

    print("KERNEL_OK")
</pallas_src>

<mosaic_0001>
module attributes {stable_mosaic.version = 11 : i64} {
  func.func @kernel(%arg0: i32, %arg1: memref<1xf32, #tpu.memory_space<smem>>, %arg2: memref<8x128xf32, #tpu.memory_space<vmem>>, %arg3: memref<128x128xf32, #tpu.memory_space<vmem>>, %arg4: memref<128x128xf32, #tpu.memory_space<vmem>>, %arg5: memref<8x128xf32, #tpu.memory_space<vmem>>, %arg6: memref<1x8x128xf32, #tpu.memory_space<vmem>>) attributes {dimension_semantics = [#tpu.dimension_semantics<parallel>], iteration_bounds = array<i64: 2>, scalar_prefetch = 1 : i64, scratch_operands = 0 : i64, tpu.core_type = #tpu.core_type<tc>, window_params = [{transform_indices = @transform_0, window_bounds = array<i64: 8, 128>}, {pipeline_mode = #tpu.pipeline_mode<synchronous>, transform_indices = @transform_1, window_bounds = array<i64: 128, 128>}, {pipeline_mode = #tpu.pipeline_mode<synchronous>, transform_indices = @transform_2, window_bounds = array<i64: 128, 128>}, {transform_indices = @transform_3, window_bounds = array<i64: 8, 128>}, {transform_indices = @transform_4, window_bounds = array<i64: 1, 8, 128>}]} {
    %c0 = arith.constant 0 : index
    %c0_0 = arith.constant 0 : index
    %0 = vector.load %arg2[%c0, %c0_0] : memref<8x128xf32, #tpu.memory_space<vmem>>, vector<8x128xf32>
    %c0_1 = arith.constant 0 : index
    %c0_2 = arith.constant 0 : index
    %1 = vector.load %arg3[%c0_1, %c0_2] : memref<128x128xf32, #tpu.memory_space<vmem>>, vector<128x128xf32>
    %cst = arith.constant dense<0.000000e+00> : vector<8x128xf32>
    %2 = tpu.matmul %0, %1, %cst {dimension_numbers = #tpu.dot_dimension_numbers<[1], [1], [0], [0], [0, 0, 1, 0], [], []>} : vector<8x128xf32>, vector<128x128xf32>, vector<8x128xf32> -> vector<8x128xf32>
    %c0_3 = arith.constant 0 : index
    %c0_4 = arith.constant 0 : index
    %3 = vector.load %arg4[%c0_3, %c0_4] : memref<128x128xf32, #tpu.memory_space<vmem>>, vector<128x128xf32>
    %cst_5 = arith.constant dense<0.000000e+00> : vector<8x128xf32>
    %4 = tpu.matmul %2, %3, %cst_5 {dimension_numbers = #tpu.dot_dimension_numbers<[1], [1], [0], [0], [0, 0, 1, 0], [], []>} : vector<8x128xf32>, vector<128x128xf32>, vector<8x128xf32> -> vector<8x128xf32>
    %c0_6 = arith.constant 0 : index
    %c0_7 = arith.constant 0 : index
    %5 = vector.load %arg5[%c0_6, %c0_7] : memref<8x128xf32, #tpu.memory_space<vmem>>, vector<8x128xf32>
    tpu.vector_store %arg5[%c0_6, %c0_7], %4 {strides = array<i32>} : memref<8x128xf32, #tpu.memory_space<vmem>>, vector<8x128xf32>,
    %6 = arith.subf %0, %2 : vector<8x128xf32>
    %7 = arith.mulf %6, %6 : vector<8x128xf32>
    %8 = vector.shape_cast %7 : vector<8x128xf32> to vector<1x8x128xf32>
    %cst_8 = arith.constant dense<0.000000e+00> : vector<1xf32>
    %9 = vector.multi_reduction <add>, %8, %cst_8 [1, 2] : vector<1x8x128xf32> to vector<1xf32>
    %10 = vector.shape_cast %9 : vector<1xf32> to vector<1x1x1xf32>
    %11 = vector.extract %10[0, 0, 0] : f32 from vector<1x1x1xf32>
    %c0_9 = arith.constant 0 : index
    %12 = memref.load %arg1[%c0_9] : memref<1xf32, #tpu.memory_space<smem>>
    %c1_i32 = arith.constant 1 : i32
    %13 = tpu.dynamic_rotate %4 by %c1_i32 dim 0 : vector<8x128xf32>, i32 -> vector<8x128xf32>
    %14 = tpu.iota {dimensions = array<i32: 0>} : vector<8x1xi32>
    %c8_i32 = arith.constant 8 : i32
    %15 = arith.muli %arg0, %c8_i32 : i32
    %16 = vector.broadcast %15 : i32 to vector<8x1xi32>
    %17 = arith.addi %16, %14 : vector<8x1xi32>
    %c8_i32_10 = arith.constant 8 : i32
    %c0_i32 = arith.constant 0 : i32
    %18 = arith.cmpi eq, %c8_i32_10, %c0_i32 : i32
    %c1_i32_11 = arith.constant 1 : i32
    %19 = arith.select %18, %c1_i32_11, %c8_i32_10 : i32
    %20 = vector.broadcast %19 : i32 to vector<8x1xi32>
    %21 = arith.remsi %17, %20 : vector<8x1xi32>
    %c0_i32_12 = arith.constant 0 : i32
    %22 = vector.broadcast %c0_i32_12 : i32 to vector<8x1xi32>
    %23 = arith.cmpi ne, %21, %22 : vector<8x1xi32>
    %c0_i32_13 = arith.constant 0 : i32
    %24 = vector.broadcast %c0_i32_13 : i32 to vector<8x1xi32>
    %25 = arith.cmpi slt, %21, %24 : vector<8x1xi32>
    %c0_i32_14 = arith.constant 0 : i32
    %26 = arith.cmpi slt, %19, %c0_i32_14 : i32
    %27 = vector.broadcast %26 : i1 to vector<8x1xi1>
    %28 = vector.broadcast %27 : vector<8x1xi1> to vector<8x1xi1>
    %29 = arith.xori %25, %28 : vector<8x1xi1>
    %30 = arith.andi %29, %23 : vector<8x1xi1>
    %31 = vector.broadcast %19 : i32 to vector<8x1xi32>
    %32 = arith.addi %21, %31 : vector<8x1xi32>
    %33 = arith.select %30, %32, %21 : vector<8x1xi1>, vector<8x1xi32>
    %c0_i32_15 = arith.constant 0 : i32
    %34 = vector.broadcast %c0_i32_15 : i32 to vector<8x1xi32>
    %35 = arith.cmpi eq, %33, %34 : vector<8x1xi32>
    %36 = vector.broadcast %12 : f32 to vector<8x128xf32>
    %37 = arith.mulf %36, %13 : vector<8x128xf32>
    %38 = arith.subf %4, %37 : vector<8x128xf32>
    %cst_16 = arith.constant 0.000000e+00 : f32
    %39 = vector.shape_cast %35 : vector<8x1xi1> to vector<8x1xi1>
    %40 = vector.broadcast %39 : vector<8x1xi1> to vector<8x128xi1>
    %41 = vector.broadcast %cst_16 : f32 to vector<8x128xf32>
    %42 = arith.select %40, %41, %38 : vector<8x128xi1>, vector<8x128xf32>
    %43 = arith.mulf %42, %42 : vector<8x128xf32>
    %44 = vector.shape_cast %43 : vector<8x128xf32> to vector<1x8x128xf32>
    %cst_17 = arith.constant dense<0.000000e+00> : vector<1xf32>
    %45 = vector.multi_reduction <add>, %44, %cst_17 [1, 2] : vector<1x8x128xf32> to vector<1xf32>
    %46 = vector.shape_cast %45 : vector<1xf32> to vector<1x1x1xf32>
    %47 = vector.extract %46[0, 0, 0] : f32 from vector<1x1x1xf32>
    %48 = tpu.iota {dimensions = array<i32: 0>} : vector<8x128xi32>
    %c0_i32_18 = arith.constant 0 : i32
    %49 = vector.broadcast %c0_i32_18 : i32 to vector<8x128xi32>
    %50 = arith.cmpi eq, %48, %49 : vector<8x128xi32>
    %c1_i32_19 = arith.constant 1 : i32
    %51 = vector.broadcast %c1_i32_19 : i32 to vector<8x128xi32>
    %52 = arith.cmpi eq, %48, %51 : vector<8x128xi32>
    %cst_20 = arith.constant 0.000000e+00 : f32
    %53 = vector.broadcast %47 : f32 to vector<8x128xf32>
    %54 = vector.broadcast %cst_20 : f32 to vector<8x128xf32>
    %55 = arith.select %52, %53, %54 : vector<8x128xi1>, vector<8x128xf32>
    %56 = vector.broadcast %11 : f32 to vector<8x128xf32>
    %57 = arith.select %50, %56, %55 : vector<8x128xi1>, vector<8x128xf32>
    %c0_21 = arith.constant 0 : index
    %c0_22 = arith.constant 0 : index
    %c0_23 = arith.constant 0 : index
    %58 = vector.load %arg6[%c0_21, %c0_22, %c0_23] : memref<1x8x128xf32, #tpu.memory_space<vmem>>, vector<1x8x128xf32>
    %59 = vector.shape_cast %58 : vector<1x8x128xf32> to vector<8x128xf32>
    %60 = vector.shape_cast %57 : vector<8x128xf32> to vector<1x8x128xf32>
    tpu.vector_store %arg6[%c0_21, %c0_22, %c0_23], %60 {strides = array<i32>} : memref<1x8x128xf32, #tpu.memory_space<vmem>>, vector<1x8x128xf32>,
    return
  }
  func.func @transform_0(%arg0: i32, %arg1: memref<1xf32, #tpu.memory_space<smem>>) -> (i32, i32) {
    %c0_i32 = arith.constant 0 : i32
    %c0_i32_0 = arith.constant 0 : i32
    return %arg0, %c0_i32 : i32, i32
  }
  func.func @transform_1(%arg0: i32, %arg1: memref<1xf32, #tpu.memory_space<smem>>) -> (i32, i32) {
    %c0_i32 = arith.constant 0 : i32
    %c0_i32_0 = arith.constant 0 : i32
    %c0_i32_1 = arith.constant 0 : i32
    return %c0_i32, %c0_i32_0 : i32, i32
  }
  func.func @transform_2(%arg0: i32, %arg1: memref<1xf32, #tpu.memory_space<smem>>) -> (i32, i32) {
    %c0_i32 = arith.constant 0 : i32
    %c0_i32_0 = arith.constant 0 : i32
    %c0_i32_1 = arith.constant 0 : i32
    return %c0_i32, %c0_i32_0 : i32, i32
  }
  func.func @transform_3(%arg0: i32, %arg1: memref<1xf32, #tpu.memory_space<smem>>) -> (i32, i32) {
    %c0_i32 = arith.constant 0 : i32
    %c0_i32_0 = arith.constant 0 : i32
    return %arg0, %c0_i32 : i32, i32
  }
  func.func @transform_4(%arg0: i32, %arg1: memref<1xf32, #tpu.memory_space<smem>>) -> (i32, i32, i32) {
    %c0_i32 = arith.constant 0 : i32
    %c0_i32_0 = arith.constant 0 : i32
    %c0_i32_1 = arith.constant 0 : i32
    return %arg0, %c0_i32, %c0_i32_0 : i32, i32, i32
  }
}

module attributes {stable_mosaic.version = 11 : i64} {
  func.func @kernel(%arg0: i32, %arg1: memref<1xf32, #tpu.memory_space<smem>>, %arg2: memref<8x128xf32, #tpu.memory_space<vmem>>, %arg3: memref<128x128xf32, #tpu.memory_space<vmem>>, %arg4: memref<128x128xf32, #tpu.memory_space<vmem>>, %arg5: memref<8x128xf32, #tpu.memory_space<vmem>>, %arg6: memref<1x8x128xf32, #tpu.memory_space<vmem>>) attributes {dimension_semantics = [#tpu.dimension_semantics<parallel>], iteration_bounds = array<i64: 2>, scalar_prefetch = 1 : i64, scratch_operands = 0 : i64, tpu.core_type = #tpu.core_type<tc>, window_params = [{transform_indices = @transform_0, window_bounds = array<i64: 8, 128>}, {pipeline_mode = #tpu.pipeline_mode<synchronous>, transform_indices = @transform_1, window_bounds = array<i64: 128, 128>}, {pipeline_mode = #tpu.pipeline_mode<synchronous>, transform_indices = @transform_2, window_bounds = array<i64: 128, 128>}, {transform_indices = @transform_3, window_bounds = array<i64: 8, 128>}, {transform_indices = @transform_4, window_bounds = array<i64: 1, 8, 128>}]} {
    %c0 = arith.constant 0 : index
    %c0_0 = arith.constant 0 : index
    %0 = vector.load %arg2[%c0, %c0_0] : memref<8x128xf32, #tpu.memory_space<vmem>>, vector<8x128xf32>
    %c0_1 = arith.constant 0 : index
    %c0_2 = arith.constant 0 : index
    %1 = vector.load %arg3[%c0_1, %c0_2] : memref<128x128xf32, #tpu.memory_space<vmem>>, vector<128x128xf32>
    %cst = arith.constant dense<0.000000e+00> : vector<8x128xf32>
    %2 = tpu.matmul %0, %1, %cst {dimension_numbers = #tpu.dot_dimension_numbers<[1], [1], [0], [0], [0, 0, 1, 0], [], []>} : vector<8x128xf32>, vector<128x128xf32>, vector<8x128xf32> -> vector<8x128xf32>
    %c0_3 = arith.constant 0 : index
    %c0_4 = arith.constant 0 : index
    %3 = vector.load %arg4[%c0_3, %c0_4] : memref<128x128xf32, #tpu.memory_space<vmem>>, vector<128x128xf32>
    %cst_5 = arith.constant dense<0.000000e+00> : vector<8x128xf32>
    %4 = tpu.matmul %2, %3, %cst_5 {dimension_numbers = #tpu.dot_dimension_numbers<[1], [1], [0], [0], [0, 0, 1, 0], [], []>} : vector<8x128xf32>, vector<128x128xf32>, vector<8x128xf32> -> vector<8x128xf32>
    %c0_6 = arith.constant 0 : index
    %c0_7 = arith.constant 0 : index
    %5 = vector.load %arg5[%c0_6, %c0_7] : memref<8x128xf32, #tpu.memory_space<vmem>>, vector<8x128xf32>
    tpu.vector_store %arg5[%c0_6, %c0_7], %4 {strides = array<i32>} : memref<8x128xf32, #tpu.memory_space<vmem>>, vector<8x128xf32>,
    %6 = arith.subf %0, %2 : vector<8x128xf32>
    %7 = arith.mulf %6, %6 : vector<8x128xf32>
    %8 = vector.shape_cast %7 : vector<8x128xf32> to vector<1x8x128xf32>
    %cst_8 = arith.constant dense<0.000000e+00> : vector<1xf32>
    %9 = vector.multi_reduction <add>, %8, %cst_8 [1, 2] : vector<1x8x128xf32> to vector<1xf32>
    %10 = vector.shape_cast %9 : vector<1xf32> to vector<1x1x1xf32>
    %11 = vector.extract %10[0, 0, 0] : f32 from vector<1x1x1xf32>
    %c0_9 = arith.constant 0 : index
    %12 = memref.load %arg1[%c0_9] : memref<1xf32, #tpu.memory_space<smem>>
    %c1_i32 = arith.constant 1 : i32
    %13 = tpu.dynamic_rotate %4 by %c1_i32 dim 0 : vector<8x128xf32>, i32 -> vector<8x128xf32>
    %14 = tpu.iota {dimensions = array<i32: 0>} : vector<8x1xi32>
    %c8_i32 = arith.constant 8 : i32
    %15 = arith.muli %arg0, %c8_i32 : i32
    %16 = vector.broadcast %15 : i32 to vector<8x1xi32>
    %17 = arith.addi %16, %14 : vector<8x1xi32>
    %c8_i32_10 = arith.constant 8 : i32
    %c0_i32 = arith.constant 0 : i32
    %18 = arith.cmpi eq, %c8_i32_10, %c0_i32 : i32
    %c1_i32_11 = arith.constant 1 : i32
    %19 = arith.select %18, %c1_i32_11, %c8_i32_10 : i32
    %20 = vector.broadcast %19 : i32 to vector<8x1xi32>
    %21 = arith.remsi %17, %20 : vector<8x1xi32>
    %c0_i32_12 = arith.constant 0 : i32
    %22 = vector.broadcast %c0_i32_12 : i32 to vector<8x1xi32>
    %23 = arith.cmpi ne, %21, %22 : vector<8x1xi32>
    %c0_i32_13 = arith.constant 0 : i32
    %24 = vector.broadcast %c0_i32_13 : i32 to vector<8x1xi32>
    %25 = arith.cmpi slt, %21, %24 : vector<8x1xi32>
    %c0_i32_14 = arith.constant 0 : i32
    %26 = arith.cmpi slt, %19, %c0_i32_14 : i32
    %27 = vector.broadcast %26 : i1 to vector<8x1xi1>
    %28 = vector.broadcast %27 : vector<8x1xi1> to vector<8x1xi1>
    %29 = arith.xori %25, %28 : vector<8x1xi1>
    %30 = arith.andi %29, %23 : vector<8x1xi1>
    %31 = vector.broadcast %19 : i32 to vector<8x1xi32>
    %32 = arith.addi %21, %31 : vector<8x1xi32>
    %33 = arith.select %30, %32, %21 : vector<8x1xi1>, vector<8x1xi32>
    %c0_i32_15 = arith.constant 0 : i32
    %34 = vector.broadcast %c0_i32_15 : i32 to vector<8x1xi32>
    %35 = arith.cmpi eq, %33, %34 : vector<8x1xi32>
    %36 = vector.broadcast %12 : f32 to vector<8x128xf32>
    %37 = arith.mulf %36, %13 : vector<8x128xf32>
    %38 = arith.subf %4, %37 : vector<8x128xf32>
    %cst_16 = arith.constant 0.000000e+00 : f32
    %39 = vector.shape_cast %35 : vector<8x1xi1> to vector<8x1xi1>
    %40 = vector.broadcast %39 : vector<8x1xi1> to vector<8x128xi1>
    %41 = vector.broadcast %cst_16 : f32 to vector<8x128xf32>
    %42 = arith.select %40, %41, %38 : vector<8x128xi1>, vector<8x128xf32>
    %43 = arith.mulf %42, %42 : vector<8x128xf32>
    %44 = vector.shape_cast %43 : vector<8x128xf32> to vector<1x8x128xf32>
    %cst_17 = arith.constant dense<0.000000e+00> : vector<1xf32>
    %45 = vector.multi_reduction <add>, %44, %cst_17 [1, 2] : vector<1x8x128xf32> to vector<1xf32>
    %46 = vector.shape_cast %45 : vector<1xf32> to vector<1x1x1xf32>
    %47 = vector.extract %46[0, 0, 0] : f32 from vector<1x1x1xf32>
    %48 = tpu.iota {dimensions = array<i32: 0>} : vector<8x128xi32>
    %c0_i32_18 = arith.constant 0 : i32
    %49 = vector.broadcast %c0_i32_18 : i32 to vector<8x128xi32>
    %50 = arith.cmpi eq, %48, %49 : vector<8x128xi32>
    %c1_i32_19 = arith.constant 1 : i32
    %51 = vector.broadcast %c1_i32_19 : i32 to vector<8x128xi32>
    %52 = arith.cmpi eq, %48, %51 : vector<8x128xi32>
    %cst_20 = arith.constant 0.000000e+00 : f32
    %53 = vector.broadcast %47 : f32 to vector<8x128xf32>
    %54 = vector.broadcast %cst_20 : f32 to vector<8x128xf32>
    %55 = arith.select %52, %53, %54 : vector<8x128xi1>, vector<8x128xf32>
    %56 = vector.broadcast %11 : f32 to vector<8x128xf32>
    %57 = arith.select %50, %56, %55 : vector<8x128xi1>, vector<8x128xf32>
    %c0_21 = arith.constant 0 : index
    %c0_22 = arith.constant 0 : index
    %c0_23 = arith.constant 0 : index
    %58 = vector.load %arg6[%c0_21, %c0_22, %c0_23] : memref<1x8x128xf32, #tpu.memory_space<vmem>>, vector<1x8x128xf32>
    %59 = vector.shape_cast %58 : vector<1x8x128xf32> to vector<8x128xf32>
    %60 = vector.shape_cast %57 : vector<8x128xf32> to vector<1x8x128xf32>
    tpu.vector_store %arg6[%c0_21, %c0_22, %c0_23], %60 {strides = array<i32>} : memref<1x8x128xf32, #tpu.memory_space<vmem>>, vector<1x8x128xf32>,
    return
  }
  func.func @transform_0(%arg0: i32, %arg1: memref<1xf32, #tpu.memory_space<smem>>) -> (i32, i32) {
    %c0_i32 = arith.constant 0 : i32
    %c0_i32_0 = arith.constant 0 : i32
    return %arg0, %c0_i32 : i32, i32
  }
  func.func @transform_1(%arg0: i32, %arg1: memref<1xf32, #tpu.memory_space<smem>>) -> (i32, i32) {
    %c0_i32 = arith.constant 0 : i32
    %c0_i32_0 = arith.constant 0 : i32
    %c0_i32_1 = arith.constant 0 : i32
    return %c0_i32, %c0_i32_0 : i32, i32
  }
  func.func @transform_2(%arg0: i32, %arg1: memref<1xf32, #tpu.memory_space<smem>>) -> (i32, i32) {
    %c0_i32 = arith.constant 0 : i32
    %c0_i32_0 = arith.constant 0 : i32
    %c0_i32_1 = arith.constant 0 : i32
    return %c0_i32, %c0_i32_0 : i32, i32
  }
  func.func @transform_3(%arg0: i32, %arg1: memref<1xf32, #tpu.memory_space<smem>>) -> (i32, i32) {
    %c0_i32 = arith.constant 0 : i32
    %c0_i32_0 = arith.constant 0 : i32
    return %arg0, %c0_i32 : i32, i32
  }
  func.func @transform_4(%arg0: i32, %arg1: memref<1xf32, #tpu.memory_space<smem>>) -> (i32, i32, i32) {
    %c0_i32 = arith.constant 0 : i32
    %c0_i32_0 = arith.constant 0 : i32
    %c0_i32_1 = arith.constant 0 : i32
    return %arg0, %c0_i32, %c0_i32_0 : i32, i32, i32
  }
}

</mosaic_0001>

<llo_original>
// kernel: tpu_custom_call.1
$region0: #{tpu_custom_call.1}
  #allocation0 [shape = 'u32[]', space=smem, size = 0x4, offset = 0x4, fixed_abs, tag = 'smem constant byte address 0x4 - core index']
  #allocation1 [shape = 'u32[144,128]{1,0:T(1,128)}', space=vmem, size = 0x12000, scoped, tag = 'internal scratch']
  #allocation2 [shape = 's32[1]{0}', space=sflag, size = 0x4, scoped, tag = 'scoped memory for tpu_custom_call.1']
  #allocation3 [shape = 'f32[1]{0:T(128)S(6)}', space=smem, size = 0x200, scoped, tag = 'prefetched SMEM operand 0']
  %s0 = inlined_call_operand.<no memory space> [shape: f32[1], index: 0, kind: input, shape index: {}]
  %s1 = inlined_call_operand.hbm [shape: f32[16,128], index: 1, kind: input, shape index: {}]
  %s2 = inlined_call_operand.hbm [shape: f32[128,128], index: 2, kind: input, shape index: {}]
  %s3 = inlined_call_operand.hbm [shape: f32[128,128], index: 3, kind: input, shape index: {}]
  %s4 = inlined_call_operand.hbm [shape: f32[16,128], index: 4, kind: output, shape index: {0}]
  %s5 = inlined_call_operand.hbm [shape: f32[2,8,128], index: 5, kind: output, shape index: {1}]
  %6 = xla_tuple %s4, %s5
  %s7 = sld [smem:[#allocation0]]
  $region65: #{tpu_custom_call.1} parent=0
    _
  %s9 = ssub.s32 1, %s7
  %s10 = scalar_select 0, %s9, %s7
  %11 = sst [smem:[#allocation3]] %s0
  $region1: #{tpu_custom_call.1} parent=0
    #allocation4 [shape = 'u8[8192]{0}', space=vmem, size = 0x2000, scoped, tag = 'input window, operand 1']
    #allocation5 [shape = 's32[2]{0}', space=sflag, size = 0x8, scoped, tag = 'scoped memory for tpu_custom_call.1']
    #allocation6 [shape = 's32[2]{0}', space=sflag, size = 0x8, scoped, tag = 'scoped memory for tpu_custom_call.1']
    #allocation7 [shape = 'u8[65536]{0}', space=vmem, size = 0x10000, scoped, tag = 'input window, operand 2, single buffered']
    #allocation8 [shape = 's32[1]{0}', space=sflag, size = 0x4, scoped, tag = 'scoped memory for tpu_custom_call.1']
    #allocation9 [shape = 'u8[65536]{0}', space=vmem, size = 0x10000, scoped, tag = 'input window, operand 3, single buffered']
    #allocation10 [shape = 'u8[8192]{0}', space=vmem, size = 0x2000, scoped, tag = 'output window, operand 0']
    #allocation11 [shape = 'u8[8192]{0}', space=vmem, size = 0x2000, scoped, tag = 'output window, operand 1']
    #allocation12 [shape = 's32[2]{0}', space=sflag, size = 0x8, scoped, tag = 'scoped memory for tpu_custom_call.1']
    %12 = vsyncpa [#allocation5], 0
    %s13 = scalar_lea.sflag [#allocation5], 1
    %14 = vsyncpa %s13, 0
    %15 = vsyncpa [#allocation8], 0
    %16 = vsyncpa [#allocation6], 0
    %s17 = scalar_lea.sflag [#allocation6], 1
    %18 = vsyncpa %s17, 0
    %19 = vsyncpa [#allocation12], 0
    %s20 = scalar_lea.sflag [#allocation12], 1
    %21 = vsyncpa %s20, 0
    loop: start=0, step=1, limit=4
    $region2: #{tpu_custom_call.1} parent=1 // loop_pre_header
      _
    $region3: #{tpu_custom_call.1} parent=1 // loop_header
      %s23 = sphi 0, %s27
      %p24 = scmp.ge.s32.totalorder %s23, 4
      %s33 = sphi 0, %s35
      %s36 = sphi 0, %s33
      %s37 = sphi 0, %s36
      %s53 = sphi 0, %s37
      %s57 = sphi 0, %s57
      %s59 = sphi 0, %s57
      %s60 = sphi 0, %s59
      %s74 = sphi 0, %s60
      %s78 = sphi 0, %s78
      %s80 = sphi 0, %s78
      %s81 = sphi 0, %s80
      %s95 = sphi 0, %s81
      %s101 = sphi 0, %s103
      %s104 = sphi 0, %s101
      %s105 = sphi 0, %s104
      %s121 = sphi 0, %s105
      %s127 = sphi 0, %s129
      %s130 = sphi 0, %s127
      %s131 = sphi 0, %s130
      %s147 = sphi 0, %s131
    $region4: #{tpu_custom_call.1} parent=1 // loop_header_branch
      %26 = sbr.rel (%p24) target = $region8
    $region5: #{tpu_custom_call.1} parent=1 // loop_body
      %s28 = ssub.s32 %s23, 1
      %s29 = ssub.s32 %s23, 2
      %s30 = sadd.s32 %s23, 1
      %s31 = ssub.s32 %s23, %s30
      %p32 = scmp.eq.s32.totalorder %s31, 0
      %s34 = sadd.s32 %s33, 1
      %s35 = scalar_select %p32, %s33, %s34
      %p38 = pneg %p32
      %p39 = scmp.eq.s32.totalorder %s23, 1
      %p40 = por %p38, %p39
      %p41 = scmp.ne.s32.totalorder %s33, %s36
      %p42 = scmp.eq.s32.totalorder %s23, 0
      %p43 = por %p41, %p42
      %p44 = scmp.ne.s32.totalorder %s33, %s36
      %p45 = scmp.eq.s32.totalorder %s28, 1
      %p46 = por %p44, %p45
      %p47 = scmp.ne.s32.totalorder %s36, %s37
      %p48 = scmp.eq.s32.totalorder %s28, 0
      %p49 = por %p47, %p48
      %p50 = scmp.ne.s32.totalorder %s36, %s37
      %p51 = scmp.eq.s32.totalorder %s29, 1
      %p52 = por %p50, %p51
      %p54 = scmp.ne.s32.totalorder %s37, %s53
      %p55 = scmp.eq.s32.totalorder %s29, 0
      %p56 = por %p54, %p55
      %s58 = sadd.s32 %s57, 1
      %p61 = scmp.eq.s32.totalorder %s23, 1
      %p62 = scmp.ne.s32.totalorder %s57, %s59
      %p63 = scmp.eq.s32.totalorder %s23, 0
      %p64 = por %p62, %p63
      %p65 = scmp.ne.s32.totalorder %s57, %s59
      %p66 = scmp.eq.s32.totalorder %s28, 1
      %p67 = por %p65, %p66
      %p68 = scmp.ne.s32.totalorder %s59, %s60
      %p69 = scmp.eq.s32.totalorder %s28, 0
      %p70 = por %p68, %p69
      %p71 = scmp.ne.s32.totalorder %s59, %s60
      %p72 = scmp.eq.s32.totalorder %s29, 1
      %p73 = por %p71, %p72
      %p75 = scmp.ne.s32.totalorder %s60, %s74
      %p76 = scmp.eq.s32.totalorder %s29, 0
      %p77 = por %p75, %p76
      %s79 = sadd.s32 %s78, 1
      %p82 = scmp.eq.s32.totalorder %s23, 1
      %p83 = scmp.ne.s32.totalorder %s78, %s80
      %p84 = scmp.eq.s32.totalorder %s23, 0
      %p85 = por %p83, %p84
      %p86 = scmp.ne.s32.totalorder %s78, %s80
      %p87 = scmp.eq.s32.totalorder %s28, 1
      %p88 = por %p86, %p87
      %p89 = scmp.ne.s32.totalorder %s80, %s81
      %p90 = scmp.eq.s32.totalorder %s28, 0
      %p91 = por %p89, %p90
      %p92 = scmp.ne.s32.totalorder %s80, %s81
      %p93 = scmp.eq.s32.totalorder %s29, 1
      %p94 = por %p92, %p93
      %p96 = scmp.ne.s32.totalorder %s81, %s95
      %p97 = scmp.eq.s32.totalorder %s29, 0
      %p98 = por %p96, %p97
      %s99 = ssub.s32 %s23, %s30
      %p100 = scmp.eq.s32.totalorder %s99, 0
      %s102 = sadd.s32 %s101, 1
      %s103 = scalar_select %p100, %s101, %s102
      %p106 = pneg %p100
      %p107 = scmp.eq.s32.totalorder %s23, 1
      %p108 = por %p106, %p107
      %p109 = scmp.ne.s32.totalorder %s101, %s104
      %p110 = scmp.eq.s32.totalorder %s23, 0
      %p111 = por %p109, %p110
      %p112 = scmp.ne.s32.totalorder %s101, %s104
      %p113 = scmp.eq.s32.totalorder %s28, 1
      %p114 = por %p112, %p113
      %p115 = scmp.ne.s32.totalorder %s104, %s105
      %p116 = scmp.eq.s32.totalorder %s28, 0
      %p117 = por %p115, %p116
      %p118 = scmp.ne.s32.totalorder %s104, %s105
      %p119 = scmp.eq.s32.totalorder %s29, 1
      %p120 = por %p118, %p119
      %p122 = scmp.ne.s32.totalorder %s105, %s121
      %p123 = scmp.eq.s32.totalorder %s29, 0
      %p124 = por %p122, %p123
      %s125 = ssub.s32 %s23, %s30
      %p126 = scmp.eq.s32.totalorder %s125, 0
      %s128 = sadd.s32 %s127, 1
      %s129 = scalar_select %p126, %s127, %s128
      %p132 = pneg %p126
      %p133 = scmp.eq.s32.totalorder %s23, 1
      %p134 = por %p132, %p133
      %p135 = scmp.ne.s32.totalorder %s127, %s130
      %p136 = scmp.eq.s32.totalorder %s23, 0
      %p137 = por %p135, %p136
      %p138 = scmp.ne.s32.totalorder %s127, %s130
      %p139 = scmp.eq.s32.totalorder %s28, 1
      %p140 = por %p138, %p139
      %p141 = scmp.ne.s32.totalorder %s130, %s131
      %p142 = scmp.eq.s32.totalorder %s28, 0
      %p143 = por %p141, %p142
      %p144 = scmp.ne.s32.totalorder %s130, %s131
      %p145 = scmp.eq.s32.totalorder %s29, 1
      %p146 = por %p144, %p145
      %p148 = scmp.ne.s32.totalorder %s131, %s147
      %p149 = scmp.eq.s32.totalorder %s29, 0
      %p150 = por %p148, %p149
      %p151 = scmp.le.s32.totalorder 1, %s23
      %p152 = scmp.lt.s32.totalorder %s23, 3
      %p153 = pnand %p151, %p152
      %p154 = pneg %p153
      // Predicated region
      $region9: #{tpu_custom_call.1} parent=5 // pred_check
        _
      $region10: #{tpu_custom_call.1} parent=5 // pred_check_branch
        %156 = sbr.rel (%p153) target = $region12
      $region11: #{tpu_custom_call.1} parent=5 // pred_region
        %s157 = ssub.s32 %s23, 1
        // Predicated region
        $region13: #{tpu_custom_call.1} parent=11 // pred_check
          %p158 = pneg %p70
        $region14: #{tpu_custom_call.1} parent=11 // pred_check_branch
          %160 = sbr.rel (%p158) target = $region16
        $region15: #{tpu_custom_call.1} parent=11 // pred_region
          %s162 = ssub.s32 2048, 2048
          %163 = vsyncadd [#allocation8], %s162
          %s164 = sshll.u32 [#allocation7], 4
          %s165 = int_to_ptr.vmem [resolvable:$true] %s164
          %170 = dma.hbm_to_vmem [thread:$0]  %s2, 2048, %s165, [#allocation8], 128, 128, 8
        $region16: #{tpu_custom_call.1} parent=11 // pred_fallthru
          _
        // Predicated region
        $region17: #{tpu_custom_call.1} parent=11 // pred_check
          %p171 = pneg %p91
        $region18: #{tpu_custom_call.1} parent=11 // pred_check_branch
          %173 = sbr.rel (%p171) target = $region20
        $region19: #{tpu_custom_call.1} parent=11 // pred_region
          %s175 = ssub.s32 2048, 2048
          %176 = vsyncadd [#allocation8], %s175
          %s177 = sshll.u32 [#allocation9], 4
          %s178 = int_to_ptr.vmem [resolvable:$true] %s177
          %183 = dma.hbm_to_vmem [thread:$0]  %s3, 2048, %s178, [#allocation8], 128, 128, 8
        $region20: #{tpu_custom_call.1} parent=11 // pred_fallthru
          _
      $region12: #{tpu_custom_call.1} parent=5 // pred_fallthru
        _
      %p184 = scmp.lt.s32.totalorder %s23, 2
      // Predicated region
      $region21: #{tpu_custom_call.1} parent=5 // pred_check
        %p185 = pneg %p184
      $region22: #{tpu_custom_call.1} parent=5 // pred_check_branch
        %187 = sbr.rel (%p185) target = $region24
      $region23: #{tpu_custom_call.1} parent=5 // pred_region
        // Predicated region
        $region25: #{tpu_custom_call.1} parent=23 // pred_check
          %p188 = pneg %p43
        $region26: #{tpu_custom_call.1} parent=23 // pred_check_branch
          %190 = sbr.rel (%p188) target = $region28
        $region27: #{tpu_custom_call.1} parent=23 // pred_region
          %s191 = sand.u32 %s33, 1
          %s192 = scalar_lea.sflag [#allocation5], %s191
          %s193 = sand.u32 %s33, 1
          %s194 = smul.addr %s193, 8
          %s195 = scalar_lea.vmem [#allocation4], %s194
          %s197 = ssub.s32 128, 128
          %198 = vsyncadd %s192, %s197
          %s199 = smul.addr %s23, 128
          %s200 = scalar_lea.hbm %s1, %s199
          %s202 = sshll.u32 %s195, 4
          %s203 = int_to_ptr.vmem [resolvable:$true] %s202
          %205 = dma.hbm_to_vmem [thread:$0]  %s200, 128, %s203, %s192
        $region28: #{tpu_custom_call.1} parent=23 // pred_fallthru
          _
      $region24: #{tpu_custom_call.1} parent=5 // pred_fallthru
        _
      %p206 = scmp.le.s32.totalorder 1, %s23
      %p207 = scmp.lt.s32.totalorder %s23, 3
      %p208 = pnand %p206, %p207
      %p209 = pneg %p208
      // Predicated region
      $region29: #{tpu_custom_call.1} parent=5 // pred_check
        _
      $region30: #{tpu_custom_call.1} parent=5 // pred_check_branch
        %211 = sbr.rel (%p208) target = $region32
      $region31: #{tpu_custom_call.1} parent=5 // pred_region
        %s212 = ssub.s32 %s23, 1
        %s213 = sand.u32 %s36, 1
        %s214 = scalar_lea.sflag [#allocation5], %s213
        %s215 = sand.u32 %s36, 1
        %s216 = smul.addr %s215, 8
        %s217 = scalar_lea.vmem [#allocation4], %s216
        // Predicated region
        $region33: #{tpu_custom_call.1} parent=31 // pred_check
          %p218 = pneg %p49
        $region34: #{tpu_custom_call.1} parent=31 // pred_check_branch
          %220 = sbr.rel (%p218) target = $region36
        $region35: #{tpu_custom_call.1} parent=31 // pred_region
          %221 = dma.done %s214, 128
        $region36: #{tpu_custom_call.1} parent=31 // pred_fallthru
          _
        // Predicated region
        $region37: #{tpu_custom_call.1} parent=31 // pred_check
          %p222 = pneg %p70
        $region38: #{tpu_custom_call.1} parent=31 // pred_check_branch
          %224 = sbr.rel (%p222) target = $region40
        $region39: #{tpu_custom_call.1} parent=31 // pred_region
          %225 = dma.done [#allocation8], 2048
        $region40: #{tpu_custom_call.1} parent=31 // pred_fallthru
          _
        // Predicated region
        $region41: #{tpu_custom_call.1} parent=31 // pred_check
          %p226 = pneg %p91
        $region42: #{tpu_custom_call.1} parent=31 // pred_check_branch
          %228 = sbr.rel (%p226) target = $region44
        $region43: #{tpu_custom_call.1} parent=31 // pred_region
          %229 = dma.done [#allocation8], 2048
        $region44: #{tpu_custom_call.1} parent=31 // pred_fallthru
          _
        %s230 = sand.u32 %s36, 1
        %s231 = scalar_lea.sflag [#allocation5], %s230
        %s232 = sand.u32 %s36, 1
        %s233 = smul.addr %s232, 8
        %s234 = scalar_lea.vmem [#allocation4], %s233
        %p235 = pneg %p49
        %p236 = pneg %p46
        %p237 = pneg %p70
        %p238 = pneg %p67
        %p239 = pneg %p91
        %p240 = pneg %p88
        %p241 = pneg %p117
        %p242 = pneg %p114
        %s243 = sand.u32 %s104, 1
        %s244 = scalar_lea.sflag [#allocation6], %s243
        %s245 = sand.u32 %s104, 1
        %s246 = smul.addr %s245, 8
        %s247 = scalar_lea.vmem [#allocation10], %s246
        %p248 = pneg %p143
        %p249 = pneg %p140
        %s250 = sand.u32 %s130, 1
        %s251 = scalar_lea.sflag [#allocation12], %s250
        %s252 = sand.u32 %s130, 1
        %s253 = smul.addr %s252, 8
        %s254 = scalar_lea.vmem [#allocation11], %s253
        %v255 = vld [vmem:[%s217] sm:$0xff]
        %v256 = vld [vmem:[#allocation7] sm:$0xff]
        %v257 = vld [vmem:[#allocation7 + $0x8] sm:$0xff]
        %v258 = vld [vmem:[#allocation7 + $0x10] sm:$0xff]
        %v259 = vld [vmem:[#allocation7 + $0x18] sm:$0xff]
        %v260 = vld [vmem:[#allocation7 + $0x20] sm:$0xff]
        %v261 = vld [vmem:[#allocation7 + $0x28] sm:$0xff]
        %v262 = vld [vmem:[#allocation7 + $0x30] sm:$0xff]
        %v263 = vld [vmem:[#allocation7 + $0x38] sm:$0xff]
        %v264 = vld [vmem:[#allocation7 + $0x40] sm:$0xff]
        %v265 = vld [vmem:[#allocation7 + $0x48] sm:$0xff]
        %v266 = vld [vmem:[#allocation7 + $0x50] sm:$0xff]
        %v267 = vld [vmem:[#allocation7 + $0x58] sm:$0xff]
        %v268 = vld [vmem:[#allocation7 + $0x60] sm:$0xff]
        %v269 = vld [vmem:[#allocation7 + $0x68] sm:$0xff]
        %v270 = vld [vmem:[#allocation7 + $0x70] sm:$0xff]
        %v271 = vld [vmem:[#allocation7 + $0x78] sm:$0xff]
        %272 = vmatprep.subr.mxu0 0.0
        %273 = vmatpush1.xpose.msra.mxu0 %v256
        %274 = vmatprep.subr.mxu0 0.0
        %275 = vmatpush1.xpose.msra.mxu0 %v257
        %276 = vmatprep.subr.mxu0 0.0
        %277 = vmatpush1.xpose.msra.mxu0 %v258
        %278 = vmatprep.subr.mxu0 0.0
        %279 = vmatpush1.xpose.msra.mxu0 %v259
        %280 = vmatprep.subr.mxu0 0.0
        %281 = vmatpush1.xpose.msra.mxu0 %v260
        %282 = vmatprep.subr.mxu0 0.0
        %283 = vmatpush1.xpose.msra.mxu0 %v261
        %284 = vmatprep.subr.mxu0 0.0
        %285 = vmatpush1.xpose.msra.mxu0 %v262
        %286 = vmatprep.subr.mxu0 0.0
        %287 = vmatpush1.xpose.msra.mxu0 %v263
        %288 = vmatprep.subr.mxu0 0.0
        %289 = vmatpush1.xpose.msra.mxu0 %v264
        %290 = vmatprep.subr.mxu0 0.0
        %291 = vmatpush1.xpose.msra.mxu0 %v265
        %292 = vmatprep.subr.mxu0 0.0
        %293 = vmatpush1.xpose.msra.mxu0 %v266
        %294 = vmatprep.subr.mxu0 0.0
        %295 = vmatpush1.xpose.msra.mxu0 %v267
        %296 = vmatprep.subr.mxu0 0.0
        %297 = vmatpush1.xpose.msra.mxu0 %v268
        %298 = vmatprep.subr.mxu0 0.0
        %299 = vmatpush1.xpose.msra.mxu0 %v269
        %300 = vmatprep.subr.mxu0 0.0
        %301 = vmatpush1.xpose.msra.mxu0 %v270
        %302 = vmatprep.subr.mxu0 0.0
        %303 = vmatpush1.xpose.msra.mxu0 %v271
        %304 = vmatprep.subr.mxu0 0.0
        %305 = vmatpush1.xpose.msra.mxu0 0.0
        %306 = vmatprep.subr.mxu0 0.0
        %307 = vmatpush1.xpose.msra.mxu0 0.0
        %308 = vmatprep.subr.mxu0 0.0
        %309 = vmatpush1.xpose.msra.mxu0 0.0
        %310 = vmatprep.subr.mxu0 0.0
        %311 = vmatpush1.xpose.msra.mxu0 0.0
        %312 = vmatprep.subr.mxu0 0.0
        %313 = vmatpush1.xpose.msra.mxu0 0.0
        %314 = vmatprep.subr.mxu0 0.0
        %315 = vmatpush1.xpose.msra.mxu0 0.0
        %316 = vmatprep.subr.mxu0 0.0
        %317 = vmatpush1.xpose.msra.mxu0 0.0
        %318 = vmatprep.subr.mxu0 0.0
        %319 = vmatpush1.xpose.msra.mxu0 0.0
        %320 = vmatprep.subr.mxu0 0.0
        %321 = vmatpush1.xpose.msra.mxu0 0.0
        %322 = vmatprep.subr.mxu0 0.0
        %323 = vmatpush1.xpose.msra.mxu0 0.0
        %324 = vmatprep.subr.mxu0 0.0
        %325 = vmatpush1.xpose.msra.mxu0 0.0
        %326 = vmatprep.subr.mxu0 0.0
        %327 = vmatpush1.xpose.msra.mxu0 0.0
        %328 = vmatprep.subr.mxu0 0.0
        %329 = vmatpush1.xpose.msra.mxu0 0.0
        %330 = vmatprep.subr.mxu0 0.0
        %331 = vmatpush1.xpose.msra.mxu0 0.0
        %332 = vmatprep.subr.mxu0 0.0
        %333 = vmatpush1.xpose.msra.mxu0 0.0
        %334 = vmatprep.subr.mxu0 0.0
        %335 = vmatpush1.xpose.msra.mxu0 0.0
        %336 = vmatprep.mubr.f32.mxu0 0.0
        %337 = vmatmul.mubr.f32.gmra.mrb[0].mxu0 %v255
        %v338 = vpop.f32.mrb[0].mxu0
        %v339 = vadd.f32 0.0, %v338
        %v340 = vpop.f32.mrb[0].mxu0
        %341 = vdwg.mxu0
        %v342 = vld [vmem:[#allocation9] sm:$0xff]
        %v343 = vld [vmem:[#allocation9 + $0x8] sm:$0xff]
        %v344 = vld [vmem:[#allocation9 + $0x10] sm:$0xff]
        %v345 = vld [vmem:[#allocation9 + $0x18] sm:$0xff]
        %v346 = vld [vmem:[#allocation9 + $0x20] sm:$0xff]
        %v347 = vld [vmem:[#allocation9 + $0x28] sm:$0xff]
        %v348 = vld [vmem:[#allocation9 + $0x30] sm:$0xff]
        %v349 = vld [vmem:[#allocation9 + $0x38] sm:$0xff]
        %v350 = vld [vmem:[#allocation9 + $0x40] sm:$0xff]
        %v351 = vld [vmem:[#allocation9 + $0x48] sm:$0xff]
        %v352 = vld [vmem:[#allocation9 + $0x50] sm:$0xff]
        %v353 = vld [vmem:[#allocation9 + $0x58] sm:$0xff]
        %v354 = vld [vmem:[#allocation9 + $0x60] sm:$0xff]
        %v355 = vld [vmem:[#allocation9 + $0x68] sm:$0xff]
        %v356 = vld [vmem:[#allocation9 + $0x70] sm:$0xff]
        %v357 = vld [vmem:[#allocation9 + $0x78] sm:$0xff]
        %358 = vmatprep.subr.mxu0 0.0
        %359 = vmatpush1.xpose.msra.mxu0 %v342
        %360 = vmatprep.subr.mxu0 0.0
        %361 = vmatpush1.xpose.msra.mxu0 %v343
        %362 = vmatprep.subr.mxu0 0.0
        %363 = vmatpush1.xpose.msra.mxu0 %v344
        %364 = vmatprep.subr.mxu0 0.0
        %365 = vmatpush1.xpose.msra.mxu0 %v345
        %366 = vmatprep.subr.mxu0 0.0
        %367 = vmatpush1.xpose.msra.mxu0 %v346
        %368 = vmatprep.subr.mxu0 0.0
        %369 = vmatpush1.xpose.msra.mxu0 %v347
        %370 = vmatprep.subr.mxu0 0.0
        %371 = vmatpush1.xpose.msra.mxu0 %v348
        %372 = vmatprep.subr.mxu0 0.0
        %373 = vmatpush1.xpose.msra.mxu0 %v349
        %374 = vmatprep.subr.mxu0 0.0
        %375 = vmatpush1.xpose.msra.mxu0 %v350
        %376 = vmatprep.subr.mxu0 0.0
        %377 = vmatpush1.xpose.msra.mxu0 %v351
        %378 = vmatprep.subr.mxu0 0.0
        %379 = vmatpush1.xpose.msra.mxu0 %v352
        %380 = vmatprep.subr.mxu0 0.0
        %381 = vmatpush1.xpose.msra.mxu0 %v353
        %382 = vmatprep.subr.mxu0 0.0
        %383 = vmatpush1.xpose.msra.mxu0 %v354
        %384 = vmatprep.subr.mxu0 0.0
        %385 = vmatpush1.xpose.msra.mxu0 %v355
        %386 = vmatprep.subr.mxu0 0.0
        %387 = vmatpush1.xpose.msra.mxu0 %v356
        %388 = vmatprep.subr.mxu0 0.0
        %389 = vmatpush1.xpose.msra.mxu0 %v357
        %390 = vmatprep.subr.mxu0 0.0
        %391 = vmatpush1.xpose.msra.mxu0 0.0
        %392 = vmatprep.subr.mxu0 0.0
        %393 = vmatpush1.xpose.msra.mxu0 0.0
        %394 = vmatprep.subr.mxu0 0.0
        %395 = vmatpush1.xpose.msra.mxu0 0.0
        %396 = vmatprep.subr.mxu0 0.0
        %397 = vmatpush1.xpose.msra.mxu0 0.0
        %398 = vmatprep.subr.mxu0 0.0
        %399 = vmatpush1.xpose.msra.mxu0 0.0
        %400 = vmatprep.subr.mxu0 0.0
        %401 = vmatpush1.xpose.msra.mxu0 0.0
        %402 = vmatprep.subr.mxu0 0.0
        %403 = vmatpush1.xpose.msra.mxu0 0.0
        %404 = vmatprep.subr.mxu0 0.0
        %405 = vmatpush1.xpose.msra.mxu0 0.0
        %406 = vmatprep.subr.mxu0 0.0
        %407 = vmatpush1.xpose.msra.mxu0 0.0
        %408 = vmatprep.subr.mxu0 0.0
        %409 = vmatpush1.xpose.msra.mxu0 0.0
        %410 = vmatprep.subr.mxu0 0.0
        %411 = vmatpush1.xpose.msra.mxu0 0.0
        %412 = vmatprep.subr.mxu0 0.0
        %413 = vmatpush1.xpose.msra.mxu0 0.0
        %414 = vmatprep.subr.mxu0 0.0
        %415 = vmatpush1.xpose.msra.mxu0 0.0
        %416 = vmatprep.subr.mxu0 0.0
        %417 = vmatpush1.xpose.msra.mxu0 0.0
        %418 = vmatprep.subr.mxu0 0.0
        %419 = vmatpush1.xpose.msra.mxu0 0.0
        %420 = vmatprep.subr.mxu0 0.0
        %421 = vmatpush1.xpose.msra.mxu0 0.0
        %422 = vmatprep.mubr.f32.mxu0 0.0
        %423 = vmatmul.mubr.f32.gmra.mrb[0].mxu0 %v339
        %v424 = vpop.f32.mrb[0].mxu0
        %v425 = vadd.f32 0.0, %v424
        %v426 = vpop.f32.mrb[0].mxu0
        %427 = vdwg.mxu0
        %428 = vst [vmem:[%s247] sm:$0xff] %v425
        %v429 = vsub.f32 %v255, %v339
        %v430 = vmul.f32 %v429, %v429
        %431 = vadd.xlane.f32.xlu0 %v430
        %v432 = vpop.xlane.xlu0 %431
        %v433 = vrot.slane %v432, 4
        %v434 = vadd.f32 %v432, %v433
        %v435 = vrot.slane %v434, 2
        %v436 = vadd.f32 %v434, %v435
        %v437 = vrot.slane %v436, 1
        %v438 = vadd.f32 %v436, %v437
        %s439 = vtos %v438
        %s440 = sld [smem:[#allocation3]]
        %v441 = vrot.slane %v425, 7
        %v442 = vlaneseq
        %v443 = vshrl.u32 %v442, 7
        %s444 = smul.u32 %s28, 8
        %v445 = vstv %s444
        %v446 = vadd.s32 %v445, %v443
        %vm447 = vcmp.lt.s32.totalorder %v446, 0
        %v448 = vsub.s32 0, %v446
        %v449 = vsel %vm447, %v448, %v446
        %v450 = vshrl.u32 %v449, 3
        %v451 = vand.u32 %v449, 7
        %v452 = vsub.s32 0, %v451
        %v453 = vsel %vm447, %v452, %v451
        %vm454 = vcmp.ne.s32.totalorder %v453, 0
        %vm455 = vcmp.lt.s32.totalorder %v453, 0
        %vm456 = vmand %vm455, %vm454
        %v457 = vadd.s32 %v453, 8
        %v458 = vsel %vm456, %v457, %v453
        %vm459 = vcmp.eq.s32.totalorder %v458, 0
        %v460 = vstv %s440
        %v461 = vmul.f32 %v460, %v441
        %v462 = vsub.f32 %v425, %v461
        %v463 = vsel %vm459, 1, 0
        %vm464 = vcmp.eq.s32.totalorder %v463, 1
        %v465 = vsel %vm464, 0.0, %v462
        %v466 = vmul.f32 %v465, %v465
        %467 = vadd.xlane.f32.xlu0 %v466
        %v468 = vpop.xlane.xlu0 %467
        %v469 = vrot.slane %v468, 4
        %v470 = vadd.f32 %v468, %v469
        %v471 = vrot.slane %v470, 2
        %v472 = vadd.f32 %v470, %v471
        %v473 = vrot.slane %v472, 1
        %v474 = vadd.f32 %v472, %v473
        %s475 = vtos %v474
        %vm476 = vcmp.eq.s32.totalorder %v443, 0
        %vm477 = vcmp.eq.s32.totalorder %v443, 1
        %v478 = vstv %s475
        %v479 = vsel %vm477, %v478, 0.0
        %v480 = vstv %s439
        %v481 = vsel %vm476, %v480, %v479
        %482 = vst [vmem:[%s254] sm:$0xff] %v481
        %s483 = sand.u32 %s104, 1
        %s484 = scalar_lea.sflag [#allocation6], %s483
        %s485 = sand.u32 %s104, 1
        %s486 = smul.addr %s485, 8
        %s487 = scalar_lea.vmem [#allocation10], %s486
        %s488 = sand.u32 %s130, 1
        %s489 = scalar_lea.sflag [#allocation12], %s488
        %s490 = sand.u32 %s130, 1
        %s491 = smul.addr %s490, 8
        %s492 = scalar_lea.vmem [#allocation11], %s491
        // Predicated region
        $region45: #{tpu_custom_call.1} parent=31 // pred_check
          %p493 = pneg %p114
        $region46: #{tpu_custom_call.1} parent=31 // pred_check_branch
          %495 = sbr.rel (%p493) target = $region48
        $region47: #{tpu_custom_call.1} parent=31 // pred_region
          %s497 = ssub.s32 128, 128
          %498 = vsyncadd %s484, %s497
          %s499 = smul.addr %s28, 128
          %s500 = scalar_lea.hbm %s4, %s499
          %s502 = sshll.u32 %s487, 4
          %s503 = int_to_ptr.vmem [resolvable:$true] %s502
          %505 = dma.vmem_to_hbm [thread:$0]  %s503, 128, %s500, %s484
        $region48: #{tpu_custom_call.1} parent=31 // pred_fallthru
          _
        // Predicated region
        $region49: #{tpu_custom_call.1} parent=31 // pred_check
          %p506 = pneg %p140
        $region50: #{tpu_custom_call.1} parent=31 // pred_check_branch
          %508 = sbr.rel (%p506) target = $region52
        $region51: #{tpu_custom_call.1} parent=31 // pred_region
          %s510 = ssub.s32 128, 128
          %511 = vsyncadd %s489, %s510
          %s512 = smul.addr %s28, 128
          %s513 = scalar_lea.hbm %s5, %s512
          %s515 = sshll.u32 %s492, 4
          %s516 = int_to_ptr.vmem [resolvable:$true] %s515
          %518 = dma.vmem_to_hbm [thread:$0]  %s516, 128, %s513, %s489
        $region52: #{tpu_custom_call.1} parent=31 // pred_fallthru
          _
      $region32: #{tpu_custom_call.1} parent=5 // pred_fallthru
        _
      %p519 = scmp.le.s32.totalorder 2, %s23
      // Predicated region
      $region53: #{tpu_custom_call.1} parent=5 // pred_check
        %p520 = pneg %p519
      $region54: #{tpu_custom_call.1} parent=5 // pred_check_branch
        %522 = sbr.rel (%p520) target = $region56
      $region55: #{tpu_custom_call.1} parent=5 // pred_region
        %s523 = ssub.s32 %s23, 2
        // Predicated region
        $region57: #{tpu_custom_call.1} parent=55 // pred_check
          %p524 = pneg %p120
        $region58: #{tpu_custom_call.1} parent=55 // pred_check_branch
          %526 = sbr.rel (%p524) target = $region60
        $region59: #{tpu_custom_call.1} parent=55 // pred_region
          %s527 = sand.u32 %s105, 1
          %s528 = scalar_lea.sflag [#allocation6], %s527
          %s529 = sand.u32 %s105, 1
          %s530 = smul.addr %s529, 8
          %s531 = scalar_lea.vmem [#allocation10], %s530
          %532 = dma.done %s528, 128
        $region60: #{tpu_custom_call.1} parent=55 // pred_fallthru
          _
        // Predicated region
        $region61: #{tpu_custom_call.1} parent=55 // pred_check
          %p533 = pneg %p146
        $region62: #{tpu_custom_call.1} parent=55 // pred_check_branch
          %535 = sbr.rel (%p533) target = $region64
        $region63: #{tpu_custom_call.1} parent=55 // pred_region
          %s536 = sand.u32 %s131, 1
          %s537 = scalar_lea.sflag [#allocation12], %s536
          %s538 = sand.u32 %s131, 1
          %s539 = smul.addr %s538, 8
          %s540 = scalar_lea.vmem [#allocation11], %s539
          %541 = dma.done %s537, 128
        $region64: #{tpu_custom_call.1} parent=55 // pred_fallthru
          _
      $region56: #{tpu_custom_call.1} parent=5 // pred_fallthru
        _
    $region6: #{tpu_custom_call.1} parent=1 // loop_footer
      %s27 = sadd.s32 1, %s23
    $region7: #{tpu_custom_call.1} parent=1 // loop_footer_branch
      %22 = sbr.rel target = $region3
    $region8: #{tpu_custom_call.1} parent=1 // loop_exit
      _
    %542 = vsyncpa [#allocation5], 1
    %s543 = scalar_lea.sflag [#allocation5], 1
    %544 = vsyncpa %s543, 1
    %545 = vsyncpa [#allocation8], 1
    %546 = vsyncpa [#allocation6], 1
    %s547 = scalar_lea.sflag [#allocation6], 1
    %548 = vsyncpa %s547, 1
    %549 = vsyncpa [#allocation12], 1
    %s550 = scalar_lea.sflag [#allocation12], 1
    %551 = vsyncpa %s550, 1

// kernel: tpu_custom_call.1
$region0: #{tpu_custom_call.1}
  #allocation0 [shape = 'u32[]', space=smem, size = 0x4, offset = 0x4, fixed_abs, tag = 'smem constant byte address 0x4 - core index']
  #allocation1 [shape = 'u32[144,128]{1,0:T(1,128)}', space=vmem, size = 0x12000, scoped, tag = 'internal scratch']
  #allocation2 [shape = 's32[1]{0}', space=sflag, size = 0x4, scoped, tag = 'scoped memory for tpu_custom_call.1']
  #allocation3 [shape = 'f32[1]{0:T(128)S(6)}', space=smem, size = 0x200, scoped, tag = 'prefetched SMEM operand 0']
  %s0 = inlined_call_operand.<no memory space> [shape: f32[1], index: 0, kind: input, shape index: {}]
  %s1 = inlined_call_operand.hbm [shape: f32[16,128], index: 1, kind: input, shape index: {}]
  %s2 = inlined_call_operand.hbm [shape: f32[128,128], index: 2, kind: input, shape index: {}]
  %s3 = inlined_call_operand.hbm [shape: f32[128,128], index: 3, kind: input, shape index: {}]
  %s4 = inlined_call_operand.hbm [shape: f32[16,128], index: 4, kind: output, shape index: {0}]
  %s5 = inlined_call_operand.hbm [shape: f32[2,8,128], index: 5, kind: output, shape index: {1}]
  %6 = xla_tuple %s4, %s5
  %s7 = sld [smem:[#allocation0]]
  $region65: #{tpu_custom_call.1} parent=0
    _
  %s9 = ssub.s32 1, %s7
  %s10 = scalar_select 0, %s9, %s7
  %11 = sst [smem:[#allocation3]] %s0
  $region1: #{tpu_custom_call.1} parent=0
    #allocation4 [shape = 'u8[8192]{0}', space=vmem, size = 0x2000, scoped, tag = 'input window, operand 1']
    #allocation5 [shape = 's32[2]{0}', space=sflag, size = 0x8, scoped, tag = 'scoped memory for tpu_custom_call.1']
    #allocation6 [shape = 's32[2]{0}', space=sflag, size = 0x8, scoped, tag = 'scoped memory for tpu_custom_call.1']
    #allocation7 [shape = 'u8[65536]{0}', space=vmem, size = 0x10000, scoped, tag = 'input window, operand 2, single buffered']
    #allocation8 [shape = 's32[1]{0}', space=sflag, size = 0x4, scoped, tag = 'scoped memory for tpu_custom_call.1']
    #allocation9 [shape = 'u8[65536]{0}', space=vmem, size = 0x10000, scoped, tag = 'input window, operand 3, single buffered']
    #allocation10 [shape = 'u8[8192]{0}', space=vmem, size = 0x2000, scoped, tag = 'output window, operand 0']
    #allocation11 [shape = 'u8[8192]{0}', space=vmem, size = 0x2000, scoped, tag = 'output window, operand 1']
    #allocation12 [shape = 's32[2]{0}', space=sflag, size = 0x8, scoped, tag = 'scoped memory for tpu_custom_call.1']
    %12 = vsyncpa [#allocation5], 0
    %s13 = scalar_lea.sflag [#allocation5], 1
    %14 = vsyncpa %s13, 0
    %15 = vsyncpa [#allocation8], 0
    %16 = vsyncpa [#allocation6], 0
    %s17 = scalar_lea.sflag [#allocation6], 1
    %18 = vsyncpa %s17, 0
    %19 = vsyncpa [#allocation12], 0
    %s20 = scalar_lea.sflag [#allocation12], 1
    %21 = vsyncpa %s20, 0
    loop: start=0, step=1, limit=4
    $region2: #{tpu_custom_call.1} parent=1 // loop_pre_header
      _
    $region3: #{tpu_custom_call.1} parent=1 // loop_header
      %s23 = sphi 0, %s27
      %p24 = scmp.ge.s32.totalorder %s23, 4
      %s33 = sphi 0, %s35
      %s36 = sphi 0, %s33
      %s37 = sphi 0, %s36
      %s53 = sphi 0, %s37
      %s57 = sphi 0, %s57
      %s59 = sphi 0, %s57
      %s60 = sphi 0, %s59
      %s74 = sphi 0, %s60
      %s78 = sphi 0, %s78
      %s80 = sphi 0, %s78
      %s81 = sphi 0, %s80
      %s95 = sphi 0, %s81
      %s101 = sphi 0, %s103
      %s104 = sphi 0, %s101
      %s105 = sphi 0, %s104
      %s121 = sphi 0, %s105
      %s127 = sphi 0, %s129
      %s130 = sphi 0, %s127
      %s131 = sphi 0, %s130
      %s147 = sphi 0, %s131
    $region4: #{tpu_custom_call.1} parent=1 // loop_header_branch
      %26 = sbr.rel (%p24) target = $region8
    $region5: #{tpu_custom_call.1} parent=1 // loop_body
      %s28 = ssub.s32 %s23, 1
      %s29 = ssub.s32 %s23, 2
      %s30 = sadd.s32 %s23, 1
      %s31 = ssub.s32 %s23, %s30
      %p32 = scmp.eq.s32.totalorder %s31, 0
      %s34 = sadd.s32 %s33, 1
      %s35 = scalar_select %p32, %s33, %s34
      %p38 = pneg %p32
      %p39 = scmp.eq.s32.totalorder %s23, 1
      %p40 = por %p38, %p39
      %p41 = scmp.ne.s32.totalorder %s33, %s36
      %p42 = scmp.eq.s32.totalorder %s23, 0
      %p43 = por %p41, %p42
      %p44 = scmp.ne.s32.totalorder %s33, %s36
      %p45 = scmp.eq.s32.totalorder %s28, 1
      %p46 = por %p44, %p45
      %p47 = scmp.ne.s32.totalorder %s36, %s37
      %p48 = scmp.eq.s32.totalorder %s28, 0
      %p49 = por %p47, %p48
      %p50 = scmp.ne.s32.totalorder %s36, %s37
      %p51 = scmp.eq.s32.totalorder %s29, 1
      %p52 = por %p50, %p51
      %p54 = scmp.ne.s32.totalorder %s37, %s53
      %p55 = scmp.eq.s32.totalorder %s29, 0
      %p56 = por %p54, %p55
      %s58 = sadd.s32 %s57, 1
      %p61 = scmp.eq.s32.totalorder %s23, 1
      %p62 = scmp.ne.s32.totalorder %s57, %s59
      %p63 = scmp.eq.s32.totalorder %s23, 0
      %p64 = por %p62, %p63
      %p65 = scmp.ne.s32.totalorder %s57, %s59
      %p66 = scmp.eq.s32.totalorder %s28, 1
      %p67 = por %p65, %p66
      %p68 = scmp.ne.s32.totalorder %s59, %s60
      %p69 = scmp.eq.s32.totalorder %s28, 0
      %p70 = por %p68, %p69
      %p71 = scmp.ne.s32.totalorder %s59, %s60
      %p72 = scmp.eq.s32.totalorder %s29, 1
      %p73 = por %p71, %p72
      %p75 = scmp.ne.s32.totalorder %s60, %s74
      %p76 = scmp.eq.s32.totalorder %s29, 0
      %p77 = por %p75, %p76
      %s79 = sadd.s32 %s78, 1
      %p82 = scmp.eq.s32.totalorder %s23, 1
      %p83 = scmp.ne.s32.totalorder %s78, %s80
      %p84 = scmp.eq.s32.totalorder %s23, 0
      %p85 = por %p83, %p84
      %p86 = scmp.ne.s32.totalorder %s78, %s80
      %p87 = scmp.eq.s32.totalorder %s28, 1
      %p88 = por %p86, %p87
      %p89 = scmp.ne.s32.totalorder %s80, %s81
      %p90 = scmp.eq.s32.totalorder %s28, 0
      %p91 = por %p89, %p90
      %p92 = scmp.ne.s32.totalorder %s80, %s81
      %p93 = scmp.eq.s32.totalorder %s29, 1
      %p94 = por %p92, %p93
      %p96 = scmp.ne.s32.totalorder %s81, %s95
      %p97 = scmp.eq.s32.totalorder %s29, 0
      %p98 = por %p96, %p97
      %s99 = ssub.s32 %s23, %s30
      %p100 = scmp.eq.s32.totalorder %s99, 0
      %s102 = sadd.s32 %s101, 1
      %s103 = scalar_select %p100, %s101, %s102
      %p106 = pneg %p100
      %p107 = scmp.eq.s32.totalorder %s23, 1
      %p108 = por %p106, %p107
      %p109 = scmp.ne.s32.totalorder %s101, %s104
      %p110 = scmp.eq.s32.totalorder %s23, 0
      %p111 = por %p109, %p110
      %p112 = scmp.ne.s32.totalorder %s101, %s104
      %p113 = scmp.eq.s32.totalorder %s28, 1
      %p114 = por %p112, %p113
      %p115 = scmp.ne.s32.totalorder %s104, %s105
      %p116 = scmp.eq.s32.totalorder %s28, 0
      %p117 = por %p115, %p116
      %p118 = scmp.ne.s32.totalorder %s104, %s105
      %p119 = scmp.eq.s32.totalorder %s29, 1
      %p120 = por %p118, %p119
      %p122 = scmp.ne.s32.totalorder %s105, %s121
      %p123 = scmp.eq.s32.totalorder %s29, 0
      %p124 = por %p122, %p123
      %s125 = ssub.s32 %s23, %s30
      %p126 = scmp.eq.s32.totalorder %s125, 0
      %s128 = sadd.s32 %s127, 1
      %s129 = scalar_select %p126, %s127, %s128
      %p132 = pneg %p126
      %p133 = scmp.eq.s32.totalorder %s23, 1
      %p134 = por %p132, %p133
      %p135 = scmp.ne.s32.totalorder %s127, %s130
      %p136 = scmp.eq.s32.totalorder %s23, 0
      %p137 = por %p135, %p136
      %p138 = scmp.ne.s32.totalorder %s127, %s130
      %p139 = scmp.eq.s32.totalorder %s28, 1
      %p140 = por %p138, %p139
      %p141 = scmp.ne.s32.totalorder %s130, %s131
      %p142 = scmp.eq.s32.totalorder %s28, 0
      %p143 = por %p141, %p142
      %p144 = scmp.ne.s32.totalorder %s130, %s131
      %p145 = scmp.eq.s32.totalorder %s29, 1
      %p146 = por %p144, %p145
      %p148 = scmp.ne.s32.totalorder %s131, %s147
      %p149 = scmp.eq.s32.totalorder %s29, 0
      %p150 = por %p148, %p149
      %p151 = scmp.le.s32.totalorder 1, %s23
      %p152 = scmp.lt.s32.totalorder %s23, 3
      %p153 = pnand %p151, %p152
      %p154 = pneg %p153
      // Predicated region
      $region9: #{tpu_custom_call.1} parent=5 // pred_check
        _
      $region10: #{tpu_custom_call.1} parent=5 // pred_check_branch
        %156 = sbr.rel (%p153) target = $region12
      $region11: #{tpu_custom_call.1} parent=5 // pred_region
        %s157 = ssub.s32 %s23, 1
        // Predicated region
        $region13: #{tpu_custom_call.1} parent=11 // pred_check
          %p158 = pneg %p70
        $region14: #{tpu_custom_call.1} parent=11 // pred_check_branch
          %160 = sbr.rel (%p158) target = $region16
        $region15: #{tpu_custom_call.1} parent=11 // pred_region
          %s162 = ssub.s32 2048, 2048
          %163 = vsyncadd [#allocation8], %s162
          %s164 = sshll.u32 [#allocation7], 4
          %s165 = int_to_ptr.vmem [resolvable:$true] %s164
          %170 = dma.hbm_to_vmem [thread:$0]  %s2, 2048, %s165, [#allocation8], 128, 128, 8
        $region16: #{tpu_custom_call.1} parent=11 // pred_fallthru
          _
        // Predicated region
        $region17: #{tpu_custom_call.1} parent=11 // pred_check
          %p171 = pneg %p91
        $region18: #{tpu_custom_call.1} parent=11 // pred_check_branch
          %173 = sbr.rel (%p171) target = $region20
        $region19: #{tpu_custom_call.1} parent=11 // pred_region
          %s175 = ssub.s32 2048, 2048
          %176 = vsyncadd [#allocation8], %s175
          %s177 = sshll.u32 [#allocation9], 4
          %s178 = int_to_ptr.vmem [resolvable:$true] %s177
          %183 = dma.hbm_to_vmem [thread:$0]  %s3, 2048, %s178, [#allocation8], 128, 128, 8
        $region20: #{tpu_custom_call.1} parent=11 // pred_fallthru
          _
      $region12: #{tpu_custom_call.1} parent=5 // pred_fallthru
        _
      %p184 = scmp.lt.s32.totalorder %s23, 2
      // Predicated region
      $region21: #{tpu_custom_call.1} parent=5 // pred_check
        %p185 = pneg %p184
      $region22: #{tpu_custom_call.1} parent=5 // pred_check_branch
        %187 = sbr.rel (%p185) target = $region24
      $region23: #{tpu_custom_call.1} parent=5 // pred_region
        // Predicated region
        $region25: #{tpu_custom_call.1} parent=23 // pred_check
          %p188 = pneg %p43
        $region26: #{tpu_custom_call.1} parent=23 // pred_check_branch
          %190 = sbr.rel (%p188) target = $region28
        $region27: #{tpu_custom_call.1} parent=23 // pred_region
          %s191 = sand.u32 %s33, 1
          %s192 = scalar_lea.sflag [#allocation5], %s191
          %s193 = sand.u32 %s33, 1
          %s194 = smul.addr %s193, 8
          %s195 = scalar_lea.vmem [#allocation4], %s194
          %s197 = ssub.s32 128, 128
          %198 = vsyncadd %s192, %s197
          %s199 = smul.addr %s23, 128
          %s200 = scalar_lea.hbm %s1, %s199
          %s202 = sshll.u32 %s195, 4
          %s203 = int_to_ptr.vmem [resolvable:$true] %s202
          %205 = dma.hbm_to_vmem [thread:$0]  %s200, 128, %s203, %s192
        $region28: #{tpu_custom_call.1} parent=23 // pred_fallthru
          _
      $region24: #{tpu_custom_call.1} parent=5 // pred_fallthru
        _
      %p206 = scmp.le.s32.totalorder 1, %s23
      %p207 = scmp.lt.s32.totalorder %s23, 3
      %p208 = pnand %p206, %p207
      %p209 = pneg %p208
      // Predicated region
      $region29: #{tpu_custom_call.1} parent=5 // pred_check
        _
      $region30: #{tpu_custom_call.1} parent=5 // pred_check_branch
        %211 = sbr.rel (%p208) target = $region32
      $region31: #{tpu_custom_call.1} parent=5 // pred_region
        %s212 = ssub.s32 %s23, 1
        %s213 = sand.u32 %s36, 1
        %s214 = scalar_lea.sflag [#allocation5], %s213
        %s215 = sand.u32 %s36, 1
        %s216 = smul.addr %s215, 8
        %s217 = scalar_lea.vmem [#allocation4], %s216
        // Predicated region
        $region33: #{tpu_custom_call.1} parent=31 // pred_check
          %p218 = pneg %p49
        $region34: #{tpu_custom_call.1} parent=31 // pred_check_branch
          %220 = sbr.rel (%p218) target = $region36
        $region35: #{tpu_custom_call.1} parent=31 // pred_region
          %221 = dma.done %s214, 128
        $region36: #{tpu_custom_call.1} parent=31 // pred_fallthru
          _
        // Predicated region
        $region37: #{tpu_custom_call.1} parent=31 // pred_check
          %p222 = pneg %p70
        $region38: #{tpu_custom_call.1} parent=31 // pred_check_branch
          %224 = sbr.rel (%p222) target = $region40
        $region39: #{tpu_custom_call.1} parent=31 // pred_region
          %225 = dma.done [#allocation8], 2048
        $region40: #{tpu_custom_call.1} parent=31 // pred_fallthru
          _
        // Predicated region
        $region41: #{tpu_custom_call.1} parent=31 // pred_check
          %p226 = pneg %p91
        $region42: #{tpu_custom_call.1} parent=31 // pred_check_branch
          %228 = sbr.rel (%p226) target = $region44
        $region43: #{tpu_custom_call.1} parent=31 // pred_region
          %229 = dma.done [#allocation8], 2048
        $region44: #{tpu_custom_call.1} parent=31 // pred_fallthru
          _
        %s230 = sand.u32 %s36, 1
        %s231 = scalar_lea.sflag [#allocation5], %s230
        %s232 = sand.u32 %s36, 1
        %s233 = smul.addr %s232, 8
        %s234 = scalar_lea.vmem [#allocation4], %s233
        %p235 = pneg %p49
        %p236 = pneg %p46
        %p237 = pneg %p70
        %p238 = pneg %p67
        %p239 = pneg %p91
        %p240 = pneg %p88
        %p241 = pneg %p117
        %p242 = pneg %p114
        %s243 = sand.u32 %s104, 1
        %s244 = scalar_lea.sflag [#allocation6], %s243
        %s245 = sand.u32 %s104, 1
        %s246 = smul.addr %s245, 8
        %s247 = scalar_lea.vmem [#allocation10], %s246
        %p248 = pneg %p143
        %p249 = pneg %p140
        %s250 = sand.u32 %s130, 1
        %s251 = scalar_lea.sflag [#allocation12], %s250
        %s252 = sand.u32 %s130, 1
        %s253 = smul.addr %s252, 8
        %s254 = scalar_lea.vmem [#allocation11], %s253
        %v255 = vld [vmem:[%s217] sm:$0xff]
        %v256 = vld [vmem:[#allocation7] sm:$0xff]
        %v257 = vld [vmem:[#allocation7 + $0x8] sm:$0xff]
        %v258 = vld [vmem:[#allocation7 + $0x10] sm:$0xff]
        %v259 = vld [vmem:[#allocation7 + $0x18] sm:$0xff]
        %v260 = vld [vmem:[#allocation7 + $0x20] sm:$0xff]
        %v261 = vld [vmem:[#allocation7 + $0x28] sm:$0xff]
        %v262 = vld [vmem:[#allocation7 + $0x30] sm:$0xff]
        %v263 = vld [vmem:[#allocation7 + $0x38] sm:$0xff]
        %v264 = vld [vmem:[#allocation7 + $0x40] sm:$0xff]
        %v265 = vld [vmem:[#allocation7 + $0x48] sm:$0xff]
        %v266 = vld [vmem:[#allocation7 + $0x50] sm:$0xff]
        %v267 = vld [vmem:[#allocation7 + $0x58] sm:$0xff]
        %v268 = vld [vmem:[#allocation7 + $0x60] sm:$0xff]
        %v269 = vld [vmem:[#allocation7 + $0x68] sm:$0xff]
        %v270 = vld [vmem:[#allocation7 + $0x70] sm:$0xff]
        %v271 = vld [vmem:[#allocation7 + $0x78] sm:$0xff]
        %272 = vmatprep.subr.mxu0 0.0
        %273 = vmatpush1.xpose.msra.mxu0 %v256
        %274 = vmatprep.subr.mxu0 0.0
        %275 = vmatpush1.xpose.msra.mxu0 %v257
        %276 = vmatprep.subr.mxu0 0.0
        %277 = vmatpush1.xpose.msra.mxu0 %v258
        %278 = vmatprep.subr.mxu0 0.0
        %279 = vmatpush1.xpose.msra.mxu0 %v259
        %280 = vmatprep.subr.mxu0 0.0
        %281 = vmatpush1.xpose.msra.mxu0 %v260
        %282 = vmatprep.subr.mxu0 0.0
        %283 = vmatpush1.xpose.msra.mxu0 %v261
        %284 = vmatprep.subr.mxu0 0.0
        %285 = vmatpush1.xpose.msra.mxu0 %v262
        %286 = vmatprep.subr.mxu0 0.0
        %287 = vmatpush1.xpose.msra.mxu0 %v263
        %288 = vmatprep.subr.mxu0 0.0
        %289 = vmatpush1.xpose.msra.mxu0 %v264
        %290 = vmatprep.subr.mxu0 0.0
        %291 = vmatpush1.xpose.msra.mxu0 %v265
        %292 = vmatprep.subr.mxu0 0.0
        %293 = vmatpush1.xpose.msra.mxu0 %v266
        %294 = vmatprep.subr.mxu0 0.0
        %295 = vmatpush1.xpose.msra.mxu0 %v267
        %296 = vmatprep.subr.mxu0 0.0
        %297 = vmatpush1.xpose.msra.mxu0 %v268
        %298 = vmatprep.subr.mxu0 0.0
        %299 = vmatpush1.xpose.msra.mxu0 %v269
        %300 = vmatprep.subr.mxu0 0.0
        %301 = vmatpush1.xpose.msra.mxu0 %v270
        %302 = vmatprep.subr.mxu0 0.0
        %303 = vmatpush1.xpose.msra.mxu0 %v271
        %304 = vmatprep.subr.mxu0 0.0
        %305 = vmatpush1.xpose.msra.mxu0 0.0
        %306 = vmatprep.subr.mxu0 0.0
        %307 = vmatpush1.xpose.msra.mxu0 0.0
        %308 = vmatprep.subr.mxu0 0.0
        %309 = vmatpush1.xpose.msra.mxu0 0.0
        %310 = vmatprep.subr.mxu0 0.0
        %311 = vmatpush1.xpose.msra.mxu0 0.0
        %312 = vmatprep.subr.mxu0 0.0
        %313 = vmatpush1.xpose.msra.mxu0 0.0
        %314 = vmatprep.subr.mxu0 0.0
        %315 = vmatpush1.xpose.msra.mxu0 0.0
        %316 = vmatprep.subr.mxu0 0.0
        %317 = vmatpush1.xpose.msra.mxu0 0.0
        %318 = vmatprep.subr.mxu0 0.0
        %319 = vmatpush1.xpose.msra.mxu0 0.0
        %320 = vmatprep.subr.mxu0 0.0
        %321 = vmatpush1.xpose.msra.mxu0 0.0
        %322 = vmatprep.subr.mxu0 0.0
        %323 = vmatpush1.xpose.msra.mxu0 0.0
        %324 = vmatprep.subr.mxu0 0.0
        %325 = vmatpush1.xpose.msra.mxu0 0.0
        %326 = vmatprep.subr.mxu0 0.0
        %327 = vmatpush1.xpose.msra.mxu0 0.0
        %328 = vmatprep.subr.mxu0 0.0
        %329 = vmatpush1.xpose.msra.mxu0 0.0
        %330 = vmatprep.subr.mxu0 0.0
        %331 = vmatpush1.xpose.msra.mxu0 0.0
        %332 = vmatprep.subr.mxu0 0.0
        %333 = vmatpush1.xpose.msra.mxu0 0.0
        %334 = vmatprep.subr.mxu0 0.0
        %335 = vmatpush1.xpose.msra.mxu0 0.0
        %336 = vmatprep.mubr.f32.mxu0 0.0
        %337 = vmatmul.mubr.f32.gmra.mrb[0].mxu0 %v255
        %v338 = vpop.f32.mrb[0].mxu0
        %v339 = vadd.f32 0.0, %v338
        %v340 = vpop.f32.mrb[0].mxu0
        %341 = vdwg.mxu0
        %v342 = vld [vmem:[#allocation9] sm:$0xff]
        %v343 = vld [vmem:[#allocation9 + $0x8] sm:$0xff]
        %v344 = vld [vmem:[#allocation9 + $0x10] sm:$0xff]
        %v345 = vld [vmem:[#allocation9 + $0x18] sm:$0xff]
        %v346 = vld [vmem:[#allocation9 + $0x20] sm:$0xff]
        %v347 = vld [vmem:[#allocation9 + $0x28] sm:$0xff]
        %v348 = vld [vmem:[#allocation9 + $0x30] sm:$0xff]
        %v349 = vld [vmem:[#allocation9 + $0x38] sm:$0xff]
        %v350 = vld [vmem:[#allocation9 + $0x40] sm:$0xff]
        %v351 = vld [vmem:[#allocation9 + $0x48] sm:$0xff]
        %v352 = vld [vmem:[#allocation9 + $0x50] sm:$0xff]
        %v353 = vld [vmem:[#allocation9 + $0x58] sm:$0xff]
        %v354 = vld [vmem:[#allocation9 + $0x60] sm:$0xff]
        %v355 = vld [vmem:[#allocation9 + $0x68] sm:$0xff]
        %v356 = vld [vmem:[#allocation9 + $0x70] sm:$0xff]
        %v357 = vld [vmem:[#allocation9 + $0x78] sm:$0xff]
        %358 = vmatprep.subr.mxu0 0.0
        %359 = vmatpush1.xpose.msra.mxu0 %v342
        %360 = vmatprep.subr.mxu0 0.0
        %361 = vmatpush1.xpose.msra.mxu0 %v343
        %362 = vmatprep.subr.mxu0 0.0
        %363 = vmatpush1.xpose.msra.mxu0 %v344
        %364 = vmatprep.subr.mxu0 0.0
        %365 = vmatpush1.xpose.msra.mxu0 %v345
        %366 = vmatprep.subr.mxu0 0.0
        %367 = vmatpush1.xpose.msra.mxu0 %v346
        %368 = vmatprep.subr.mxu0 0.0
        %369 = vmatpush1.xpose.msra.mxu0 %v347
        %370 = vmatprep.subr.mxu0 0.0
        %371 = vmatpush1.xpose.msra.mxu0 %v348
        %372 = vmatprep.subr.mxu0 0.0
        %373 = vmatpush1.xpose.msra.mxu0 %v349
        %374 = vmatprep.subr.mxu0 0.0
        %375 = vmatpush1.xpose.msra.mxu0 %v350
        %376 = vmatprep.subr.mxu0 0.0
        %377 = vmatpush1.xpose.msra.mxu0 %v351
        %378 = vmatprep.subr.mxu0 0.0
        %379 = vmatpush1.xpose.msra.mxu0 %v352
        %380 = vmatprep.subr.mxu0 0.0
        %381 = vmatpush1.xpose.msra.mxu0 %v353
        %382 = vmatprep.subr.mxu0 0.0
        %383 = vmatpush1.xpose.msra.mxu0 %v354
        %384 = vmatprep.subr.mxu0 0.0
        %385 = vmatpush1.xpose.msra.mxu0 %v355
        %386 = vmatprep.subr.mxu0 0.0
        %387 = vmatpush1.xpose.msra.mxu0 %v356
        %388 = vmatprep.subr.mxu0 0.0
        %389 = vmatpush1.xpose.msra.mxu0 %v357
        %390 = vmatprep.subr.mxu0 0.0
        %391 = vmatpush1.xpose.msra.mxu0 0.0
        %392 = vmatprep.subr.mxu0 0.0
        %393 = vmatpush1.xpose.msra.mxu0 0.0
        %394 = vmatprep.subr.mxu0 0.0
        %395 = vmatpush1.xpose.msra.mxu0 0.0
        %396 = vmatprep.subr.mxu0 0.0
        %397 = vmatpush1.xpose.msra.mxu0 0.0
        %398 = vmatprep.subr.mxu0 0.0
        %399 = vmatpush1.xpose.msra.mxu0 0.0
        %400 = vmatprep.subr.mxu0 0.0
        %401 = vmatpush1.xpose.msra.mxu0 0.0
        %402 = vmatprep.subr.mxu0 0.0
        %403 = vmatpush1.xpose.msra.mxu0 0.0
        %404 = vmatprep.subr.mxu0 0.0
        %405 = vmatpush1.xpose.msra.mxu0 0.0
        %406 = vmatprep.subr.mxu0 0.0
        %407 = vmatpush1.xpose.msra.mxu0 0.0
        %408 = vmatprep.subr.mxu0 0.0
        %409 = vmatpush1.xpose.msra.mxu0 0.0
        %410 = vmatprep.subr.mxu0 0.0
        %411 = vmatpush1.xpose.msra.mxu0 0.0
        %412 = vmatprep.subr.mxu0 0.0
        %413 = vmatpush1.xpose.msra.mxu0 0.0
        %414 = vmatprep.subr.mxu0 0.0
        %415 = vmatpush1.xpose.msra.mxu0 0.0
        %416 = vmatprep.subr.mxu0 0.0
        %417 = vmatpush1.xpose.msra.mxu0 0.0
        %418 = vmatprep.subr.mxu0 0.0
        %419 = vmatpush1.xpose.msra.mxu0 0.0
        %420 = vmatprep.subr.mxu0 0.0
        %421 = vmatpush1.xpose.msra.mxu0 0.0
        %422 = vmatprep.mubr.f32.mxu0 0.0
        %423 = vmatmul.mubr.f32.gmra.mrb[0].mxu0 %v339
        %v424 = vpop.f32.mrb[0].mxu0
        %v425 = vadd.f32 0.0, %v424
        %v426 = vpop.f32.mrb[0].mxu0
        %427 = vdwg.mxu0
        %428 = vst [vmem:[%s247] sm:$0xff] %v425
        %v429 = vsub.f32 %v255, %v339
        %v430 = vmul.f32 %v429, %v429
        %431 = vadd.xlane.f32.xlu0 %v430
        %v432 = vpop.xlane.xlu0 %431
        %v433 = vrot.slane %v432, 4
        %v434 = vadd.f32 %v432, %v433
        %v435 = vrot.slane %v434, 2
        %v436 = vadd.f32 %v434, %v435
        %v437 = vrot.slane %v436, 1
        %v438 = vadd.f32 %v436, %v437
        %s439 = vtos %v438
        %s440 = sld [smem:[#allocation3]]
        %v441 = vrot.slane %v425, 7
        %v442 = vlaneseq
        %v443 = vshrl.u32 %v442, 7
        %s444 = smul.u32 %s28, 8
        %v445 = vstv %s444
        %v446 = vadd.s32 %v445, %v443
        %vm447 = vcmp.lt.s32.totalorder %v446, 0
        %v448 = vsub.s32 0, %v446
        %v449 = vsel %vm447, %v448, %v446
        %v450 = vshrl.u32 %v449, 3
        %v451 = vand.u32 %v449, 7
        %v452 = vsub.s32 0, %v451
        %v453 = vsel %vm447, %v452, %v451
        %vm454 = vcmp.ne.s32.totalorder %v453, 0
        %vm455 = vcmp.lt.s32.totalorder %v453, 0
        %vm456 = vmand %vm455, %vm454
        %v457 = vadd.s32 %v453, 8
        %v458 = vsel %vm456, %v457, %v453
        %vm459 = vcmp.eq.s32.totalorder %v458, 0
        %v460 = vstv %s440
        %v461 = vmul.f32 %v460, %v441
        %v462 = vsub.f32 %v425, %v461
        %v463 = vsel %vm459, 1, 0
        %vm464 = vcmp.eq.s32.totalorder %v463, 1
        %v465 = vsel %vm464, 0.0, %v462
        %v466 = vmul.f32 %v465, %v465
        %467 = vadd.xlane.f32.xlu0 %v466
        %v468 = vpop.xlane.xlu0 %467
        %v469 = vrot.slane %v468, 4
        %v470 = vadd.f32 %v468, %v469
        %v471 = vrot.slane %v470, 2
        %v472 = vadd.f32 %v470, %v471
        %v473 = vrot.slane %v472, 1
        %v474 = vadd.f32 %v472, %v473
        %s475 = vtos %v474
        %vm476 = vcmp.eq.s32.totalorder %v443, 0
        %vm477 = vcmp.eq.s32.totalorder %v443, 1
        %v478 = vstv %s475
        %v479 = vsel %vm477, %v478, 0.0
        %v480 = vstv %s439
        %v481 = vsel %vm476, %v480, %v479
        %482 = vst [vmem:[%s254] sm:$0xff] %v481
        %s483 = sand.u32 %s104, 1
        %s484 = scalar_lea.sflag [#allocation6], %s483
        %s485 = sand.u32 %s104, 1
        %s486 = smul.addr %s485, 8
        %s487 = scalar_lea.vmem [#allocation10], %s486
        %s488 = sand.u32 %s130, 1
        %s489 = scalar_lea.sflag [#allocation12], %s488
        %s490 = sand.u32 %s130, 1
        %s491 = smul.addr %s490, 8
        %s492 = scalar_lea.vmem [#allocation11], %s491
        // Predicated region
        $region45: #{tpu_custom_call.1} parent=31 // pred_check
          %p493 = pneg %p114
        $region46: #{tpu_custom_call.1} parent=31 // pred_check_branch
          %495 = sbr.rel (%p493) target = $region48
        $region47: #{tpu_custom_call.1} parent=31 // pred_region
          %s497 = ssub.s32 128, 128
          %498 = vsyncadd %s484, %s497
          %s499 = smul.addr %s28, 128
          %s500 = scalar_lea.hbm %s4, %s499
          %s502 = sshll.u32 %s487, 4
          %s503 = int_to_ptr.vmem [resolvable:$true] %s502
          %505 = dma.vmem_to_hbm [thread:$0]  %s503, 128, %s500, %s484
        $region48: #{tpu_custom_call.1} parent=31 // pred_fallthru
          _
        // Predicated region
        $region49: #{tpu_custom_call.1} parent=31 // pred_check
          %p506 = pneg %p140
        $region50: #{tpu_custom_call.1} parent=31 // pred_check_branch
          %508 = sbr.rel (%p506) target = $region52
        $region51: #{tpu_custom_call.1} parent=31 // pred_region
          %s510 = ssub.s32 128, 128
          %511 = vsyncadd %s489, %s510
          %s512 = smul.addr %s28, 128
          %s513 = scalar_lea.hbm %s5, %s512
          %s515 = sshll.u32 %s492, 4
          %s516 = int_to_ptr.vmem [resolvable:$true] %s515
          %518 = dma.vmem_to_hbm [thread:$0]  %s516, 128, %s513, %s489
        $region52: #{tpu_custom_call.1} parent=31 // pred_fallthru
          _
      $region32: #{tpu_custom_call.1} parent=5 // pred_fallthru
        _
      %p519 = scmp.le.s32.totalorder 2, %s23
      // Predicated region
      $region53: #{tpu_custom_call.1} parent=5 // pred_check
        %p520 = pneg %p519
      $region54: #{tpu_custom_call.1} parent=5 // pred_check_branch
        %522 = sbr.rel (%p520) target = $region56
      $region55: #{tpu_custom_call.1} parent=5 // pred_region
        %s523 = ssub.s32 %s23, 2
        // Predicated region
        $region57: #{tpu_custom_call.1} parent=55 // pred_check
          %p524 = pneg %p120
        $region58: #{tpu_custom_call.1} parent=55 // pred_check_branch
          %526 = sbr.rel (%p524) target = $region60
        $region59: #{tpu_custom_call.1} parent=55 // pred_region
          %s527 = sand.u32 %s105, 1
          %s528 = scalar_lea.sflag [#allocation6], %s527
          %s529 = sand.u32 %s105, 1
          %s530 = smul.addr %s529, 8
          %s531 = scalar_lea.vmem [#allocation10], %s530
          %532 = dma.done %s528, 128
        $region60: #{tpu_custom_call.1} parent=55 // pred_fallthru
          _
        // Predicated region
        $region61: #{tpu_custom_call.1} parent=55 // pred_check
          %p533 = pneg %p146
        $region62: #{tpu_custom_call.1} parent=55 // pred_check_branch
          %535 = sbr.rel (%p533) target = $region64
        $region63: #{tpu_custom_call.1} parent=55 // pred_region
          %s536 = sand.u32 %s131, 1
          %s537 = scalar_lea.sflag [#allocation12], %s536
          %s538 = sand.u32 %s131, 1
          %s539 = smul.addr %s538, 8
          %s540 = scalar_lea.vmem [#allocation11], %s539
          %541 = dma.done %s537, 128
        $region64: #{tpu_custom_call.1} parent=55 // pred_fallthru
          _
      $region56: #{tpu_custom_call.1} parent=5 // pred_fallthru
        _
    $region6: #{tpu_custom_call.1} parent=1 // loop_footer
      %s27 = sadd.s32 1, %s23
    $region7: #{tpu_custom_call.1} parent=1 // loop_footer_branch
      %22 = sbr.rel target = $region3
    $region8: #{tpu_custom_call.1} parent=1 // loop_exit
      _
    %542 = vsyncpa [#allocation5], 1
    %s543 = scalar_lea.sflag [#allocation5], 1
    %544 = vsyncpa %s543, 1
    %545 = vsyncpa [#allocation8], 1
    %546 = vsyncpa [#allocation6], 1
    %s547 = scalar_lea.sflag [#allocation6], 1
    %548 = vsyncpa %s547, 1
    %549 = vsyncpa [#allocation12], 1
    %s550 = scalar_lea.sflag [#allocation12], 1
    %551 = vsyncpa %s550, 1

</llo_original>
